<compile_context>
chip_gen: v5e
topology: v5e:2x2
jax: 0.10.0
libtpu: 0.0.40
codegen_flags: <defaults>
</compile_context>

<pallas_src>
import functools

import jax
import jax.numpy as jnp
from jax.experimental import pallas as pl
from jax.experimental.pallas import tpu as pltpu


def _embedding_gather_kernel(apply_scale, tile_n,
                             idx_ref, scale_ref, w_hbm, o_hbm,
                             buf, gsem, wsem):
    """Double-buffered row gather: HBM table -> VMEM slot -> HBM output.

    idx_ref:   (N,)  int32, SMEM (scalar prefetch) -- flat token ids
    scale_ref: (1,)  float32, SMEM                 -- embed_scale (maybe unused)
    w_hbm:     (V, D) HBM ref (pl.ANY)             -- embedding table
    o_hbm:     (N, D) HBM ref (pl.ANY)             -- flat output
    buf:       (2, tile_n, D) VMEM scratch         -- gather double buffer
    gsem/wsem: (2,) DMA semaphores                 -- gather / writeback, per slot
    """
    i = pl.program_id(0)
    num = pl.num_programs(0)
    slot = i % 2
    nxt = 1 - slot

    def issue_gathers(tile_idx, slot_idx):
        base = pl.multiple_of(tile_idx * tile_n, tile_n)
        # Static Python loop -> fully unrolled DMA-issue sequence.
        for r in range(tile_n):
            tok = idx_ref[base + r]
            pltpu.make_async_copy(w_hbm.at[tok], buf.at[slot_idx, r],
                                  gsem.at[slot_idx]).start()

    # Prime the pipeline with tile 0's gathers.
    @pl.when(i == 0)
    def _():
        issue_gathers(0, 0)

    # Slot `nxt` held tile i-1; its writeback was started at the end of the
    # previous step.  Drain it before overwriting the slot.
    @pl.when(i >= 1)
    def _():
        prev = pl.multiple_of((i - 1) * tile_n, tile_n)
        pltpu.make_async_copy(buf.at[nxt], o_hbm.at[pl.ds(prev, tile_n)],
                              wsem.at[nxt]).wait()

    # Prefetch the NEXT tile's rows before waiting on the current tile, so the
    # gather latency hides behind this tile's drain / scale / writeback.
    @pl.when(i + 1 < num)
    def _():
        issue_gathers(i + 1, nxt)

    # One bulk wait: every row copy signals gsem[slot] with identical byte
    # counts, so a descriptor covering the whole tile drains them all at once.
    cur = pl.multiple_of(i * tile_n, tile_n)
    pltpu.make_async_copy(o_hbm.at[pl.ds(cur, tile_n)], buf.at[slot],
                          gsem.at[slot]).wait()

    if apply_scale:
        buf[slot] = (buf[slot] * scale_ref[0]).astype(buf.dtype)

    # Single block DMA writeback of the current tile to HBM.
    wb = pltpu.make_async_copy(buf.at[slot], o_hbm.at[pl.ds(cur, tile_n)],
                               wsem.at[slot])
    wb.start()

    @pl.when(i == num - 1)
    def _():
        wb.wait()


def _pick_tile(n, row_bytes):
    # Biggest row-tile that divides n and keeps the (2, tile_n, D) gather
    # double buffer well inside the scoped-VMEM default on every generation
    # (v5e 16 MiB, v6e/v7x 32 MiB): cap each slot at 4 MiB.
    budget = 4 << 20
    for cand in (512, 256, 128, 64, 32, 16, 8):
        if n % cand == 0 and cand * row_bytes <= budget:
            return cand
    return n


@functools.partial(jax.jit, static_argnames=("tile_n",))
def embedding_forward(indices, weight, embed_scale=None, *, tile_n=None):
    """Pallas embedding lookup.

    indices: (B, S) int32
    weight:  (V, D); D a multiple of 128 (256 for bf16) keeps DMAs lane-dense
    embed_scale: optional scalar (Gemma3 scaled word embedding)
    returns: (B, S, D) in weight.dtype
    """
    b, s = indices.shape
    v, d = weight.shape
    n = b * s

    itemsize = jnp.dtype(weight.dtype).itemsize
    pack = itemsize < 4 and (d * itemsize) % 4 == 0
    if pack:
        # Gather packed 32-bit rows so single-row DMAs stay sublane-dense.
        per_u32 = 4 // itemsize
        d_eff = d // per_u32
        table = jax.lax.bitcast_convert_type(
            weight.reshape(v, d_eff, per_u32), jnp.uint32)
        table_itemsize = 4
    else:
        d_eff, table, table_itemsize = d, weight, itemsize

    row_bytes = d_eff * table_itemsize
    if tile_n is None:
        tile_n = _pick_tile(n, row_bytes)
    assert n % tile_n == 0, (n, tile_n)
    num_tiles = n // tile_n

    flat_idx = jnp.clip(indices.reshape(n).astype(jnp.int32), 0, v - 1)

    apply_scale_in_kernel = (embed_scale is not None) and not pack
    scale_arr = (jnp.asarray(embed_scale, jnp.float32).reshape(1)
                 if apply_scale_in_kernel else jnp.ones((1,), jnp.float32))

    out_flat = pl.pallas_call(
        functools.partial(_embedding_gather_kernel, apply_scale_in_kernel,
                          tile_n),
        out_shape=jax.ShapeDtypeStruct((n, d_eff), table.dtype),
        grid_spec=pltpu.PrefetchScalarGridSpec(
            num_scalar_prefetch=1,                                   # ids -> SMEM
            grid=(num_tiles,),
            in_specs=[
                pl.BlockSpec(memory_space=pltpu.MemorySpace.SMEM),   # embed_scale
                pl.BlockSpec(memory_space=pl.ANY),                   # table (HBM)
            ],
            out_specs=pl.BlockSpec(memory_space=pl.ANY),             # output (HBM)
            scratch_shapes=[
                pltpu.VMEM((2, tile_n, d_eff), table.dtype),         # gather dbuf
                pltpu.SemaphoreType.DMA((2,)),                       # gather sems
                pltpu.SemaphoreType.DMA((2,)),                       # writeback sems
            ],
        ),
        compiler_params=pltpu.CompilerParams(
            # cross-step pipeline dependency (prime at i==0, consume at i+1)
            # must run sequentially on one core.
            dimension_semantics=("arbitrary",),
            has_side_effects=True,
        ),
        cost_estimate=pl.CostEstimate(
            flops=0, transcendentals=0,
            bytes_accessed=2 * n * d_eff * table_itemsize),
    )(flat_idx, scale_arr, table)

    if pack:
        out = jax.lax.bitcast_convert_type(out_flat, weight.dtype).reshape(n, d)
    else:
        out = out_flat
    if embed_scale is not None and not apply_scale_in_kernel:
        out = out * jnp.asarray(embed_scale, weight.dtype)
    return out.reshape(b, s, d)


if __name__ == "__main__":
    # Small shapes consistent with the module: batch=2, seq=8, vocab=256.
    B, S, V, D = 2, 8, 256, 128

    key = jax.random.PRNGKey(0)
    k_idx, k_w = jax.random.split(key)

    indices = jax.random.randint(k_idx, (B, S), 0, V, dtype=jnp.int32)
    weight = jax.random.normal(k_w, (V, D), dtype=jnp.float32)

    # 1) Plain f32 lookup (single-tile path), must match the gather exactly.
    y = jax.block_until_ready(embedding_forward(indices, weight))
    ref = weight[indices]
    assert y.shape == (B, S, D)
    assert jnp.array_equal(y, ref), "mismatch vs reference gather"

    # 2) Scaled (Gemma3) variant with tile_n=8 -> 2 grid steps, exercising the
    #    cross-tile double-buffered gather pipeline + in-kernel scale epilogue.
    scale = 2.0
    y2 = jax.block_until_ready(embedding_forward(indices, weight, scale,
                                                 tile_n=8))
    assert jnp.allclose(y2, ref * scale), "mismatch vs scaled reference gather"

    # 3) bf16 table (packed-u32 gather path), D multiple of 256 keeps the
    #    packed rows lane-dense; also multi-tile.
    Db = 256
    weight_bf16 = jax.random.normal(k_w, (V, Db), dtype=jnp.float32).astype(
        jnp.bfloat16)
    yb = jax.block_until_ready(embedding_forward(indices, weight_bf16,
                                                 tile_n=8))
    refb = weight_bf16[indices]
    assert yb.dtype == jnp.bfloat16 and yb.shape == (B, S, Db)
    assert jnp.array_equal(yb, refb), "mismatch vs bf16 reference gather"

    print("KERNEL_OK")
</pallas_src>

<mosaic_0001>
module attributes {stable_mosaic.version = 11 : i64} {
  func.func @_embedding_gather_kernel(%arg0: i32, %arg1: memref<16xi32, #tpu.memory_space<smem>>, %arg2: memref<1xf32, #tpu.memory_space<smem>>, %arg3: memref<256x128xf32, #tpu.memory_space<any>>, %arg4: memref<16x128xf32, #tpu.memory_space<any>>, %arg5: memref<2x16x128xf32, #tpu.memory_space<vmem>>, %arg6: memref<2x!tpu.dma_semaphore, #tpu.memory_space<semaphore_mem>>, %arg7: memref<2x!tpu.dma_semaphore, #tpu.memory_space<semaphore_mem>>) attributes {dimension_semantics = [#tpu.dimension_semantics<arbitrary>], iteration_bounds = array<i64: 1>, scalar_prefetch = 1 : i64, scratch_operands = 3 : i64, tpu.core_type = #tpu.core_type<tc>, window_params = [{transform_indices = @transform_0, window_bounds = array<i64: 1>}, {}, {}]} {
    %c2_i32 = arith.constant 2 : i32
    %c0_i32 = arith.constant 0 : i32
    %0 = arith.cmpi eq, %c2_i32, %c0_i32 : i32
    %c1_i32 = arith.constant 1 : i32
    %1 = arith.select %0, %c1_i32, %c2_i32 : i32
    %2 = arith.remsi %arg0, %1 : i32
    %c0_i32_0 = arith.constant 0 : i32
    %3 = arith.cmpi ne, %2, %c0_i32_0 : i32
    %c0_i32_1 = arith.constant 0 : i32
    %4 = arith.cmpi slt, %2, %c0_i32_1 : i32
    %c0_i32_2 = arith.constant 0 : i32
    %5 = arith.cmpi slt, %1, %c0_i32_2 : i32
    %6 = arith.xori %4, %5 : i1
    %7 = arith.andi %6, %3 : i1
    %8 = arith.addi %2, %1 : i32
    %9 = arith.select %7, %8, %2 : i32
    %c1_i32_3 = arith.constant 1 : i32
    %10 = arith.subi %c1_i32_3, %9 : i32
    %c0_i32_4 = arith.constant 0 : i32
    %11 = arith.cmpi eq, %arg0, %c0_i32_4 : i32
    %12 = arith.extui %11 : i1 to i32
    %c0_i32_5 = arith.constant 0 : i32
    %13 = arith.cmpi ne, %12, %c0_i32_5 : i32
    scf.if %13 {
      %c0_i32_19 = arith.constant 0 : i32
      %36 = tpu.assume_multiple %c0_i32_19, 16 : i32
      %c0_i32_20 = arith.constant 0 : i32
      %37 = arith.addi %36, %c0_i32_20 : i32
      %38 = arith.index_cast %37 : i32 to index
      %39 = memref.load %arg1[%38] : memref<16xi32, #tpu.memory_space<smem>>
      %c0_i32_21 = arith.constant 0 : i32
      %c0_i32_22 = arith.constant 0 : i32
      %c0_i32_23 = arith.constant 0 : i32
      %c0_i32_24 = arith.constant 0 : i32
      %40 = tpu.memref_slice %arg3[%39, %c0_i32_24] : memref<256x128xf32, #tpu.memory_space<any>> -> memref<1x128xf32, #tpu.memory_space<any>>
      %41 = tpu.memref_squeeze %40 : memref<1x128xf32, #tpu.memory_space<any>> -> memref<128xf32, #tpu.memory_space<any>>
      %c0_i32_25 = arith.constant 0 : i32
      %42 = tpu.memref_slice %arg5[%c0_i32_21, %c0_i32_22, %c0_i32_25] : memref<2x16x128xf32, #tpu.memory_space<vmem>> -> memref<1x1x128xf32, #tpu.memory_space<vmem>>
      %43 = tpu.memref_squeeze %42 : memref<1x1x128xf32, #tpu.memory_space<vmem>> -> memref<128xf32, #tpu.memory_space<vmem>>
      %44 = tpu.memref_slice %arg6[%c0_i32_23] : memref<2x!tpu.dma_semaphore, #tpu.memory_space<semaphore_mem>> -> memref<1x!tpu.dma_semaphore, #tpu.memory_space<semaphore_mem>>
      %45 = tpu.memref_squeeze %44 : memref<1x!tpu.dma_semaphore, #tpu.memory_space<semaphore_mem>> -> memref<!tpu.dma_semaphore, #tpu.memory_space<semaphore_mem>>
      tpu.enqueue_dma source(%41 : memref<128xf32, #tpu.memory_space<any>>) target(%43 : memref<128xf32, #tpu.memory_space<vmem>>) target_semaphore(%45 : memref<!tpu.dma_semaphore, #tpu.memory_space<semaphore_mem>>)
      %c1_i32_26 = arith.constant 1 : i32
      %46 = arith.addi %36, %c1_i32_26 : i32
      %47 = arith.index_cast %46 : i32 to index
      %48 = memref.load %arg1[%47] : memref<16xi32, #tpu.memory_space<smem>>
      %c0_i32_27 = arith.constant 0 : i32
      %c1_i32_28 = arith.constant 1 : i32
      %c0_i32_29 = arith.constant 0 : i32
      %c0_i32_30 = arith.constant 0 : i32
      %49 = tpu.memref_slice %arg3[%48, %c0_i32_30] : memref<256x128xf32, #tpu.memory_space<any>> -> memref<1x128xf32, #tpu.memory_space<any>>
      %50 = tpu.memref_squeeze %49 : memref<1x128xf32, #tpu.memory_space<any>> -> memref<128xf32, #tpu.memory_space<any>>
      %c0_i32_31 = arith.constant 0 : i32
      %51 = tpu.memref_slice %arg5[%c0_i32_27, %c1_i32_28, %c0_i32_31] : memref<2x16x128xf32, #tpu.memory_space<vmem>> -> memref<1x1x128xf32, #tpu.memory_space<vmem>>
      %52 = tpu.memref_squeeze %51 : memref<1x1x128xf32, #tpu.memory_space<vmem>> -> memref<128xf32, #tpu.memory_space<vmem>>
      %53 = tpu.memref_slice %arg6[%c0_i32_29] : memref<2x!tpu.dma_semaphore, #tpu.memory_space<semaphore_mem>> -> memref<1x!tpu.dma_semaphore, #tpu.memory_space<semaphore_mem>>
      %54 = tpu.memref_squeeze %53 : memref<1x!tpu.dma_semaphore, #tpu.memory_space<semaphore_mem>> -> memref<!tpu.dma_semaphore, #tpu.memory_space<semaphore_mem>>
      tpu.enqueue_dma source(%50 : memref<128xf32, #tpu.memory_space<any>>) target(%52 : memref<128xf32, #tpu.memory_space<vmem>>) target_semaphore(%54 : memref<!tpu.dma_semaphore, #tpu.memory_space<semaphore_mem>>)
      %c2_i32_32 = arith.constant 2 : i32
      %55 = arith.addi %36, %c2_i32_32 : i32
      %56 = arith.index_cast %55 : i32 to index
      %57 = memref.load %arg1[%56] : memref<16xi32, #tpu.memory_space<smem>>
      %c0_i32_33 = arith.constant 0 : i32
      %c2_i32_34 = arith.constant 2 : i32
      %c0_i32_35 = arith.constant 0 : i32
      %c0_i32_36 = arith.constant 0 : i32
      %58 = tpu.memref_slice %arg3[%57, %c0_i32_36] : memref<256x128xf32, #tpu.memory_space<any>> -> memref<1x128xf32, #tpu.memory_space<any>>
      %59 = tpu.memref_squeeze %58 : memref<1x128xf32, #tpu.memory_space<any>> -> memref<128xf32, #tpu.memory_space<any>>
      %c0_i32_37 = arith.constant 0 : i32
      %60 = tpu.memref_slice %arg5[%c0_i32_33, %c2_i32_34, %c0_i32_37] : memref<2x16x128xf32, #tpu.memory_space<vmem>> -> memref<1x1x128xf32, #tpu.memory_space<vmem>>
      %61 = tpu.memref_squeeze %60 : memref<1x1x128xf32, #tpu.memory_space<vmem>> -> memref<128xf32, #tpu.memory_space<vmem>>
      %62 = tpu.memref_slice %arg6[%c0_i32_35] : memref<2x!tpu.dma_semaphore, #tpu.memory_space<semaphore_mem>> -> memref<1x!tpu.dma_semaphore, #tpu.memory_space<semaphore_mem>>
      %63 = tpu.memref_squeeze %62 : memref<1x!tpu.dma_semaphore, #tpu.memory_space<semaphore_mem>> -> memref<!tpu.dma_semaphore, #tpu.memory_space<semaphore_mem>>
      tpu.enqueue_dma source(%59 : memref<128xf32, #tpu.memory_space<any>>) target(%61 : memref<128xf32, #tpu.memory_space<vmem>>) target_semaphore(%63 : memref<!tpu.dma_semaphore, #tpu.memory_space<semaphore_mem>>)
      %c3_i32 = arith.constant 3 : i32
      %64 = arith.addi %36, %c3_i32 : i32
      %65 = arith.index_cast %64 : i32 to index
      %66 = memref.load %arg1[%65] : memref<16xi32, #tpu.memory_space<smem>>
      %c0_i32_38 = arith.constant 0 : i32
      %c3_i32_39 = arith.constant 3 : i32
      %c0_i32_40 = arith.constant 0 : i32
      %c0_i32_41 = arith.constant 0 : i32
      %67 = tpu.memref_slice %arg3[%66, %c0_i32_41] : memref<256x128xf32, #tpu.memory_space<any>> -> memref<1x128xf32, #tpu.memory_space<any>>
      %68 = tpu.memref_squeeze %67 : memref<1x128xf32, #tpu.memory_space<any>> -> memref<128xf32, #tpu.memory_space<any>>
      %c0_i32_42 = arith.constant 0 : i32
      %69 = tpu.memref_slice %arg5[%c0_i32_38, %c3_i32_39, %c0_i32_42] : memref<2x16x128xf32, #tpu.memory_space<vmem>> -> memref<1x1x128xf32, #tpu.memory_space<vmem>>
      %70 = tpu.memref_squeeze %69 : memref<1x1x128xf32, #tpu.memory_space<vmem>> -> memref<128xf32, #tpu.memory_space<vmem>>
      %71 = tpu.memref_slice %arg6[%c0_i32_40] : memref<2x!tpu.dma_semaphore, #tpu.memory_space<semaphore_mem>> -> memref<1x!tpu.dma_semaphore, #tpu.memory_space<semaphore_mem>>
      %72 = tpu.memref_squeeze %71 : memref<1x!tpu.dma_semaphore, #tpu.memory_space<semaphore_mem>> -> memref<!tpu.dma_semaphore, #tpu.memory_space<semaphore_mem>>
      tpu.enqueue_dma source(%68 : memref<128xf32, #tpu.memory_space<any>>) target(%70 : memref<128xf32, #tpu.memory_space<vmem>>) target_semaphore(%72 : memref<!tpu.dma_semaphore, #tpu.memory_space<semaphore_mem>>)
      %c4_i32 = arith.constant 4 : i32
      %73 = arith.addi %36, %c4_i32 : i32
      %74 = arith.index_cast %73 : i32 to index
      %75 = memref.load %arg1[%74] : memref<16xi32, #tpu.memory_space<smem>>
      %c0_i32_43 = arith.constant 0 : i32
      %c4_i32_44 = arith.constant 4 : i32
      %c0_i32_45 = arith.constant 0 : i32
      %c0_i32_46 = arith.constant 0 : i32
      %76 = tpu.memref_slice %arg3[%75, %c0_i32_46] : memref<256x128xf32, #tpu.memory_space<any>> -> memref<1x128xf32, #tpu.memory_space<any>>
      %77 = tpu.memref_squeeze %76 : memref<1x128xf32, #tpu.memory_space<any>> -> memref<128xf32, #tpu.memory_space<any>>
      %c0_i32_47 = arith.constant 0 : i32
      %78 = tpu.memref_slice %arg5[%c0_i32_43, %c4_i32_44, %c0_i32_47] : memref<2x16x128xf32, #tpu.memory_space<vmem>> -> memref<1x1x128xf32, #tpu.memory_space<vmem>>
      %79 = tpu.memref_squeeze %78 : memref<1x1x128xf32, #tpu.memory_space<vmem>> -> memref<128xf32, #tpu.memory_space<vmem>>
      %80 = tpu.memref_slice %arg6[%c0_i32_45] : memref<2x!tpu.dma_semaphore, #tpu.memory_space<semaphore_mem>> -> memref<1x!tpu.dma_semaphore, #tpu.memory_space<semaphore_mem>>
      %81 = tpu.memref_squeeze %80 : memref<1x!tpu.dma_semaphore, #tpu.memory_space<semaphore_mem>> -> memref<!tpu.dma_semaphore, #tpu.memory_space<semaphore_mem>>
      tpu.enqueue_dma source(%77 : memref<128xf32, #tpu.memory_space<any>>) target(%79 : memref<128xf32, #tpu.memory_space<vmem>>) target_semaphore(%81 : memref<!tpu.dma_semaphore, #tpu.memory_space<semaphore_mem>>)
      %c5_i32 = arith.constant 5 : i32
      %82 = arith.addi %36, %c5_i32 : i32
      %83 = arith.index_cast %82 : i32 to index
      %84 = memref.load %arg1[%83] : memref<16xi32, #tpu.memory_space<smem>>
      %c0_i32_48 = arith.constant 0 : i32
      %c5_i32_49 = arith.constant 5 : i32
      %c0_i32_50 = arith.constant 0 : i32
      %c0_i32_51 = arith.constant 0 : i32
      %85 = tpu.memref_slice %arg3[%84, %c0_i32_51] : memref<256x128xf32, #tpu.memory_space<any>> -> memref<1x128xf32, #tpu.memory_space<any>>
      %86 = tpu.memref_squeeze %85 : memref<1x128xf32, #tpu.memory_space<any>> -> memref<128xf32, #tpu.memory_space<any>>
      %c0_i32_52 = arith.constant 0 : i32
      %87 = tpu.memref_slice %arg5[%c0_i32_48, %c5_i32_49, %c0_i32_52] : memref<2x16x128xf32, #tpu.memory_space<vmem>> -> memref<1x1x128xf32, #tpu.memory_space<vmem>>
      %88 = tpu.memref_squeeze %87 : memref<1x1x128xf32, #tpu.memory_space<vmem>> -> memref<128xf32, #tpu.memory_space<vmem>>
      %89 = tpu.memref_slice %arg6[%c0_i32_50] : memref<2x!tpu.dma_semaphore, #tpu.memory_space<semaphore_mem>> -> memref<1x!tpu.dma_semaphore, #tpu.memory_space<semaphore_mem>>
      %90 = tpu.memref_squeeze %89 : memref<1x!tpu.dma_semaphore, #tpu.memory_space<semaphore_mem>> -> memref<!tpu.dma_semaphore, #tpu.memory_space<semaphore_mem>>
      tpu.enqueue_dma source(%86 : memref<128xf32, #tpu.memory_space<any>>) target(%88 : memref<128xf32, #tpu.memory_space<vmem>>) target_semaphore(%90 : memref<!tpu.dma_semaphore, #tpu.memory_space<semaphore_mem>>)
      %c6_i32 = arith.constant 6 : i32
      %91 = arith.addi %36, %c6_i32 : i32
      %92 = arith.index_cast %91 : i32 to index
      %93 = memref.load %arg1[%92] : memref<16xi32, #tpu.memory_space<smem>>
      %c0_i32_53 = arith.constant 0 : i32
      %c6_i32_54 = arith.constant 6 : i32
      %c0_i32_55 = arith.constant 0 : i32
      %c0_i32_56 = arith.constant 0 : i32
      %94 = tpu.memref_slice %arg3[%93, %c0_i32_56] : memref<256x128xf32, #tpu.memory_space<any>> -> memref<1x128xf32, #tpu.memory_space<any>>
      %95 = tpu.memref_squeeze %94 : memref<1x128xf32, #tpu.memory_space<any>> -> memref<128xf32, #tpu.memory_space<any>>
      %c0_i32_57 = arith.constant 0 : i32
      %96 = tpu.memref_slice %arg5[%c0_i32_53, %c6_i32_54, %c0_i32_57] : memref<2x16x128xf32, #tpu.memory_space<vmem>> -> memref<1x1x128xf32, #tpu.memory_space<vmem>>
      %97 = tpu.memref_squeeze %96 : memref<1x1x128xf32, #tpu.memory_space<vmem>> -> memref<128xf32, #tpu.memory_space<vmem>>
      %98 = tpu.memref_slice %arg6[%c0_i32_55] : memref<2x!tpu.dma_semaphore, #tpu.memory_space<semaphore_mem>> -> memref<1x!tpu.dma_semaphore, #tpu.memory_space<semaphore_mem>>
      %99 = tpu.memref_squeeze %98 : memref<1x!tpu.dma_semaphore, #tpu.memory_space<semaphore_mem>> -> memref<!tpu.dma_semaphore, #tpu.memory_space<semaphore_mem>>
      tpu.enqueue_dma source(%95 : memref<128xf32, #tpu.memory_space<any>>) target(%97 : memref<128xf32, #tpu.memory_space<vmem>>) target_semaphore(%99 : memref<!tpu.dma_semaphore, #tpu.memory_space<semaphore_mem>>)
      %c7_i32 = arith.constant 7 : i32
      %100 = arith.addi %36, %c7_i32 : i32
      %101 = arith.index_cast %100 : i32 to index
      %102 = memref.load %arg1[%101] : memref<16xi32, #tpu.memory_space<smem>>
      %c0_i32_58 = arith.constant 0 : i32
      %c7_i32_59 = arith.constant 7 : i32
      %c0_i32_60 = arith.constant 0 : i32
      %c0_i32_61 = arith.constant 0 : i32
      %103 = tpu.memref_slice %arg3[%102, %c0_i32_61] : memref<256x128xf32, #tpu.memory_space<any>> -> memref<1x128xf32, #tpu.memory_space<any>>
      %104 = tpu.memref_squeeze %103 : memref<1x128xf32, #tpu.memory_space<any>> -> memref<128xf32, #tpu.memory_space<any>>
      %c0_i32_62 = arith.constant 0 : i32
      %105 = tpu.memref_slice %arg5[%c0_i32_58, %c7_i32_59, %c0_i32_62] : memref<2x16x128xf32, #tpu.memory_space<vmem>> -> memref<1x1x128xf32, #tpu.memory_space<vmem>>
      %106 = tpu.memref_squeeze %105 : memref<1x1x128xf32, #tpu.memory_space<vmem>> -> memref<128xf32, #tpu.memory_space<vmem>>
      %107 = tpu.memref_slice %arg6[%c0_i32_60] : memref<2x!tpu.dma_semaphore, #tpu.memory_space<semaphore_mem>> -> memref<1x!tpu.dma_semaphore, #tpu.memory_space<semaphore_mem>>
      %108 = tpu.memref_squeeze %107 : memref<1x!tpu.dma_semaphore, #tpu.memory_space<semaphore_mem>> -> memref<!tpu.dma_semaphore, #tpu.memory_space<semaphore_mem>>
      tpu.enqueue_dma source(%104 : memref<128xf32, #tpu.memory_space<any>>) target(%106 : memref<128xf32, #tpu.memory_space<vmem>>) target_semaphore(%108 : memref<!tpu.dma_semaphore, #tpu.memory_space<semaphore_mem>>)
      %c8_i32 = arith.constant 8 : i32
      %109 = arith.addi %36, %c8_i32 : i32
      %110 = arith.index_cast %109 : i32 to index
      %111 = memref.load %arg1[%110] : memref<16xi32, #tpu.memory_space<smem>>
      %c0_i32_63 = arith.constant 0 : i32
      %c8_i32_64 = arith.constant 8 : i32
      %c0_i32_65 = arith.constant 0 : i32
      %c0_i32_66 = arith.constant 0 : i32
      %112 = tpu.memref_slice %arg3[%111, %c0_i32_66] : memref<256x128xf32, #tpu.memory_space<any>> -> memref<1x128xf32, #tpu.memory_space<any>>
      %113 = tpu.memref_squeeze %112 : memref<1x128xf32, #tpu.memory_space<any>> -> memref<128xf32, #tpu.memory_space<any>>
      %c0_i32_67 = arith.constant 0 : i32
      %114 = tpu.memref_slice %arg5[%c0_i32_63, %c8_i32_64, %c0_i32_67] : memref<2x16x128xf32, #tpu.memory_space<vmem>> -> memref<1x1x128xf32, #tpu.memory_space<vmem>>
      %115 = tpu.memref_squeeze %114 : memref<1x1x128xf32, #tpu.memory_space<vmem>> -> memref<128xf32, #tpu.memory_space<vmem>>
      %116 = tpu.memref_slice %arg6[%c0_i32_65] : memref<2x!tpu.dma_semaphore, #tpu.memory_space<semaphore_mem>> -> memref<1x!tpu.dma_semaphore, #tpu.memory_space<semaphore_mem>>
      %117 = tpu.memref_squeeze %116 : memref<1x!tpu.dma_semaphore, #tpu.memory_space<semaphore_mem>> -> memref<!tpu.dma_semaphore, #tpu.memory_space<semaphore_mem>>
      tpu.enqueue_dma source(%113 : memref<128xf32, #tpu.memory_space<any>>) target(%115 : memref<128xf32, #tpu.memory_space<vmem>>) target_semaphore(%117 : memref<!tpu.dma_semaphore, #tpu.memory_space<semaphore_mem>>)
      %c9_i32 = arith.constant 9 : i32
      %118 = arith.addi %36, %c9_i32 : i32
      %119 = arith.index_cast %118 : i32 to index
      %120 = memref.load %arg1[%119] : memref<16xi32, #tpu.memory_space<smem>>
      %c0_i32_68 = arith.constant 0 : i32
      %c9_i32_69 = arith.constant 9 : i32
      %c0_i32_70 = arith.constant 0 : i32
      %c0_i32_71 = arith.constant 0 : i32
      %121 = tpu.memref_slice %arg3[%120, %c0_i32_71] : memref<256x128xf32, #tpu.memory_space<any>> -> memref<1x128xf32, #tpu.memory_space<any>>
      %122 = tpu.memref_squeeze %121 : memref<1x128xf32, #tpu.memory_space<any>> -> memref<128xf32, #tpu.memory_space<any>>
      %c0_i32_72 = arith.constant 0 : i32
      %123 = tpu.memref_slice %arg5[%c0_i32_68, %c9_i32_69, %c0_i32_72] : memref<2x16x128xf32, #tpu.memory_space<vmem>> -> memref<1x1x128xf32, #tpu.memory_space<vmem>>
      %124 = tpu.memref_squeeze %123 : memref<1x1x128xf32, #tpu.memory_space<vmem>> -> memref<128xf32, #tpu.memory_space<vmem>>
      %125 = tpu.memref_slice %arg6[%c0_i32_70] : memref<2x!tpu.dma_semaphore, #tpu.memory_space<semaphore_mem>> -> memref<1x!tpu.dma_semaphore, #tpu.memory_space<semaphore_mem>>
      %126 = tpu.memref_squeeze %125 : memref<1x!tpu.dma_semaphore, #tpu.memory_space<semaphore_mem>> -> memref<!tpu.dma_semaphore, #tpu.memory_space<semaphore_mem>>
      tpu.enqueue_dma source(%122 : memref<128xf32, #tpu.memory_space<any>>) target(%124 : memref<128xf32, #tpu.memory_space<vmem>>) target_semaphore(%126 : memref<!tpu.dma_semaphore, #tpu.memory_space<semaphore_mem>>)
      %c10_i32 = arith.constant 10 : i32
      %127 = arith.addi %36, %c10_i32 : i32
      %128 = arith.index_cast %127 : i32 to index
      %129 = memref.load %arg1[%128] : memref<16xi32, #tpu.memory_space<smem>>
      %c0_i32_73 = arith.constant 0 : i32
      %c10_i32_74 = arith.constant 10 : i32
      %c0_i32_75 = arith.constant 0 : i32
      %c0_i32_76 = arith.constant 0 : i32
      %130 = tpu.memref_slice %arg3[%129, %c0_i32_76] : memref<256x128xf32, #tpu.memory_space<any>> -> memref<1x128xf32, #tpu.memory_space<any>>
      %131 = tpu.memref_squeeze %130 : memref<1x128xf32, #tpu.memory_space<any>> -> memref<128xf32, #tpu.memory_space<any>>
      %c0_i32_77 = arith.constant 0 : i32
      %132 = tpu.memref_slice %arg5[%c0_i32_73, %c10_i32_74, %c0_i32_77] : memref<2x16x128xf32, #tpu.memory_space<vmem>> -> memref<1x1x128xf32, #tpu.memory_space<vmem>>
      %133 = tpu.memref_squeeze %132 : memref<1x1x128xf32, #tpu.memory_space<vmem>> -> memref<128xf32, #tpu.memory_space<vmem>>
      %134 = tpu.memref_slice %arg6[%c0_i32_75] : memref<2x!tpu.dma_semaphore, #tpu.memory_space<semaphore_mem>> -> memref<1x!tpu.dma_semaphore, #tpu.memory_space<semaphore_mem>>
      %135 = tpu.memref_squeeze %134 : memref<1x!tpu.dma_semaphore, #tpu.memory_space<semaphore_mem>> -> memref<!tpu.dma_semaphore, #tpu.memory_space<semaphore_mem>>
      tpu.enqueue_dma source(%131 : memref<128xf32, #tpu.memory_space<any>>) target(%133 : memref<128xf32, #tpu.memory_space<vmem>>) target_semaphore(%135 : memref<!tpu.dma_semaphore, #tpu.memory_space<semaphore_mem>>)
      %c11_i32 = arith.constant 11 : i32
      %136 = arith.addi %36, %c11_i32 : i32
      %137 = arith.index_cast %136 : i32 to index
      %138 = memref.load %arg1[%137] : memref<16xi32, #tpu.memory_space<smem>>
      %c0_i32_78 = arith.constant 0 : i32
      %c11_i32_79 = arith.constant 11 : i32
      %c0_i32_80 = arith.constant 0 : i32
      %c0_i32_81 = arith.constant 0 : i32
      %139 = tpu.memref_slice %arg3[%138, %c0_i32_81] : memref<256x128xf32, #tpu.memory_space<any>> -> memref<1x128xf32, #tpu.memory_space<any>>
      %140 = tpu.memref_squeeze %139 : memref<1x128xf32, #tpu.memory_space<any>> -> memref<128xf32, #tpu.memory_space<any>>
      %c0_i32_82 = arith.constant 0 : i32
      %141 = tpu.memref_slice %arg5[%c0_i32_78, %c11_i32_79, %c0_i32_82] : memref<2x16x128xf32, #tpu.memory_space<vmem>> -> memref<1x1x128xf32, #tpu.memory_space<vmem>>
      %142 = tpu.memref_squeeze %141 : memref<1x1x128xf32, #tpu.memory_space<vmem>> -> memref<128xf32, #tpu.memory_space<vmem>>
      %143 = tpu.memref_slice %arg6[%c0_i32_80] : memref<2x!tpu.dma_semaphore, #tpu.memory_space<semaphore_mem>> -> memref<1x!tpu.dma_semaphore, #tpu.memory_space<semaphore_mem>>
      %144 = tpu.memref_squeeze %143 : memref<1x!tpu.dma_semaphore, #tpu.memory_space<semaphore_mem>> -> memref<!tpu.dma_semaphore, #tpu.memory_space<semaphore_mem>>
      tpu.enqueue_dma source(%140 : memref<128xf32, #tpu.memory_space<any>>) target(%142 : memref<128xf32, #tpu.memory_space<vmem>>) target_semaphore(%144 : memref<!tpu.dma_semaphore, #tpu.memory_space<semaphore_mem>>)
      %c12_i32 = arith.constant 12 : i32
      %145 = arith.addi %36, %c12_i32 : i32
      %146 = arith.index_cast %145 : i32 to index
      %147 = memref.load %arg1[%146] : memref<16xi32, #tpu.memory_space<smem>>
      %c0_i32_83 = arith.constant 0 : i32
      %c12_i32_84 = arith.constant 12 : i32
      %c0_i32_85 = arith.constant 0 : i32
      %c0_i32_86 = arith.constant 0 : i32
      %148 = tpu.memref_slice %arg3[%147, %c0_i32_86] : memref<256x128xf32, #tpu.memory_space<any>> -> memref<1x128xf32, #tpu.memory_space<any>>
      %149 = tpu.memref_squeeze %148 : memref<1x128xf32, #tpu.memory_space<any>> -> memref<128xf32, #tpu.memory_space<any>>
      %c0_i32_87 = arith.constant 0 : i32
      %150 = tpu.memref_slice %arg5[%c0_i32_83, %c12_i32_84, %c0_i32_87] : memref<2x16x128xf32, #tpu.memory_space<vmem>> -> memref<1x1x128xf32, #tpu.memory_space<vmem>>
      %151 = tpu.memref_squeeze %150 : memref<1x1x128xf32, #tpu.memory_space<vmem>> -> memref<128xf32, #tpu.memory_space<vmem>>
      %152 = tpu.memref_slice %arg6[%c0_i32_85] : memref<2x!tpu.dma_semaphore, #tpu.memory_space<semaphore_mem>> -> memref<1x!tpu.dma_semaphore, #tpu.memory_space<semaphore_mem>>
      %153 = tpu.memref_squeeze %152 : memref<1x!tpu.dma_semaphore, #tpu.memory_space<semaphore_mem>> -> memref<!tpu.dma_semaphore, #tpu.memory_space<semaphore_mem>>
      tpu.enqueue_dma source(%149 : memref<128xf32, #tpu.memory_space<any>>) target(%151 : memref<128xf32, #tpu.memory_space<vmem>>) target_semaphore(%153 : memref<!tpu.dma_semaphore, #tpu.memory_space<semaphore_mem>>)
      %c13_i32 = arith.constant 13 : i32
      %154 = arith.addi %36, %c13_i32 : i32
      %155 = arith.index_cast %154 : i32 to index
      %156 = memref.load %arg1[%155] : memref<16xi32, #tpu.memory_space<smem>>
      %c0_i32_88 = arith.constant 0 : i32
      %c13_i32_89 = arith.constant 13 : i32
      %c0_i32_90 = arith.constant 0 : i32
      %c0_i32_91 = arith.constant 0 : i32
      %157 = tpu.memref_slice %arg3[%156, %c0_i32_91] : memref<256x128xf32, #tpu.memory_space<any>> -> memref<1x128xf32, #tpu.memory_space<any>>
      %158 = tpu.memref_squeeze %157 : memref<1x128xf32, #tpu.memory_space<any>> -> memref<128xf32, #tpu.memory_space<any>>
      %c0_i32_92 = arith.constant 0 : i32
      %159 = tpu.memref_slice %arg5[%c0_i32_88, %c13_i32_89, %c0_i32_92] : memref<2x16x128xf32, #tpu.memory_space<vmem>> -> memref<1x1x128xf32, #tpu.memory_space<vmem>>
      %160 = tpu.memref_squeeze %159 : memref<1x1x128xf32, #tpu.memory_space<vmem>> -> memref<128xf32, #tpu.memory_space<vmem>>
      %161 = tpu.memref_slice %arg6[%c0_i32_90] : memref<2x!tpu.dma_semaphore, #tpu.memory_space<semaphore_mem>> -> memref<1x!tpu.dma_semaphore, #tpu.memory_space<semaphore_mem>>
      %162 = tpu.memref_squeeze %161 : memref<1x!tpu.dma_semaphore, #tpu.memory_space<semaphore_mem>> -> memref<!tpu.dma_semaphore, #tpu.memory_space<semaphore_mem>>
      tpu.enqueue_dma source(%158 : memref<128xf32, #tpu.memory_space<any>>) target(%160 : memref<128xf32, #tpu.memory_space<vmem>>) target_semaphore(%162 : memref<!tpu.dma_semaphore, #tpu.memory_space<semaphore_mem>>)
      %c14_i32 = arith.constant 14 : i32
      %163 = arith.addi %36, %c14_i32 : i32
      %164 = arith.index_cast %163 : i32 to index
      %165 = memref.load %arg1[%164] : memref<16xi32, #tpu.memory_space<smem>>
      %c0_i32_93 = arith.constant 0 : i32
      %c14_i32_94 = arith.constant 14 : i32
      %c0_i32_95 = arith.constant 0 : i32
      %c0_i32_96 = arith.constant 0 : i32
      %166 = tpu.memref_slice %arg3[%165, %c0_i32_96] : memref<256x128xf32, #tpu.memory_space<any>> -> memref<1x128xf32, #tpu.memory_space<any>>
      %167 = tpu.memref_squeeze %166 : memref<1x128xf32, #tpu.memory_space<any>> -> memref<128xf32, #tpu.memory_space<any>>
      %c0_i32_97 = arith.constant 0 : i32
      %168 = tpu.memref_slice %arg5[%c0_i32_93, %c14_i32_94, %c0_i32_97] : memref<2x16x128xf32, #tpu.memory_space<vmem>> -> memref<1x1x128xf32, #tpu.memory_space<vmem>>
      %169 = tpu.memref_squeeze %168 : memref<1x1x128xf32, #tpu.memory_space<vmem>> -> memref<128xf32, #tpu.memory_space<vmem>>
      %170 = tpu.memref_slice %arg6[%c0_i32_95] : memref<2x!tpu.dma_semaphore, #tpu.memory_space<semaphore_mem>> -> memref<1x!tpu.dma_semaphore, #tpu.memory_space<semaphore_mem>>
      %171 = tpu.memref_squeeze %170 : memref<1x!tpu.dma_semaphore, #tpu.memory_space<semaphore_mem>> -> memref<!tpu.dma_semaphore, #tpu.memory_space<semaphore_mem>>
      tpu.enqueue_dma source(%167 : memref<128xf32, #tpu.memory_space<any>>) target(%169 : memref<128xf32, #tpu.memory_space<vmem>>) target_semaphore(%171 : memref<!tpu.dma_semaphore, #tpu.memory_space<semaphore_mem>>)
      %c15_i32 = arith.constant 15 : i32
      %172 = arith.addi %36, %c15_i32 : i32
      %173 = arith.index_cast %172 : i32 to index
      %174 = memref.load %arg1[%173] : memref<16xi32, #tpu.memory_space<smem>>
      %c0_i32_98 = arith.constant 0 : i32
      %c15_i32_99 = arith.constant 15 : i32
      %c0_i32_100 = arith.constant 0 : i32
      %c0_i32_101 = arith.constant 0 : i32
      %175 = tpu.memref_slice %arg3[%174, %c0_i32_101] : memref<256x128xf32, #tpu.memory_space<any>> -> memref<1x128xf32, #tpu.memory_space<any>>
      %176 = tpu.memref_squeeze %175 : memref<1x128xf32, #tpu.memory_space<any>> -> memref<128xf32, #tpu.memory_space<any>>
      %c0_i32_102 = arith.constant 0 : i32
      %177 = tpu.memref_slice %arg5[%c0_i32_98, %c15_i32_99, %c0_i32_102] : memref<2x16x128xf32, #tpu.memory_space<vmem>> -> memref<1x1x128xf32, #tpu.memory_space<vmem>>
      %178 = tpu.memref_squeeze %177 : memref<1x1x128xf32, #tpu.memory_space<vmem>> -> memref<128xf32, #tpu.memory_space<vmem>>
      %179 = tpu.memref_slice %arg6[%c0_i32_100] : memref<2x!tpu.dma_semaphore, #tpu.memory_space<semaphore_mem>> -> memref<1x!tpu.dma_semaphore, #tpu.memory_space<semaphore_mem>>
      %180 = tpu.memref_squeeze %179 : memref<1x!tpu.dma_semaphore, #tpu.memory_space<semaphore_mem>> -> memref<!tpu.dma_semaphore, #tpu.memory_space<semaphore_mem>>
      tpu.enqueue_dma source(%176 : memref<128xf32, #tpu.memory_space<any>>) target(%178 : memref<128xf32, #tpu.memory_space<vmem>>) target_semaphore(%180 : memref<!tpu.dma_semaphore, #tpu.memory_space<semaphore_mem>>)
    } else {
    }
    %c1_i32_6 = arith.constant 1 : i32
    %14 = arith.cmpi sge, %arg0, %c1_i32_6 : i32
    %15 = arith.extui %14 : i1 to i32
    %c0_i32_7 = arith.constant 0 : i32
    %16 = arith.cmpi ne, %15, %c0_i32_7 : i32
    scf.if %16 {
      %c1_i32_19 = arith.constant 1 : i32
      %36 = arith.subi %arg0, %c1_i32_19 : i32
      %c16_i32_20 = arith.constant 16 : i32
      %37 = arith.muli %36, %c16_i32_20 : i32
      %38 = tpu.assume_multiple %37, 16 : i32
      %c0_i32_21 = arith.constant 0 : i32
      %c0_i32_22 = arith.constant 0 : i32
      %39 = tpu.memref_slice %arg5[%10, %c0_i32_21, %c0_i32_22] : memref<2x16x128xf32, #tpu.memory_space<vmem>> -> memref<1x16x128xf32, #tpu.memory_space<vmem>>
      %40 = tpu.memref_squeeze %39 : memref<1x16x128xf32, #tpu.memory_space<vmem>> -> memref<16x128xf32, #tpu.memory_space<vmem>>
      %c0_i32_23 = arith.constant 0 : i32
      %41 = tpu.memref_slice %arg4[%38, %c0_i32_23] : memref<16x128xf32, #tpu.memory_space<any>> -> memref<16x128xf32, #tpu.memory_space<any>>
      %42 = tpu.memref_slice %arg7[%10] : memref<2x!tpu.dma_semaphore, #tpu.memory_space<semaphore_mem>> -> memref<1x!tpu.dma_semaphore, #tpu.memory_space<semaphore_mem>>
      %43 = tpu.memref_squeeze %42 : memref<1x!tpu.dma_semaphore, #tpu.memory_space<semaphore_mem>> -> memref<!tpu.dma_semaphore, #tpu.memory_space<semaphore_mem>>
      tpu.wait_dma2 semaphore(%43 : memref<!tpu.dma_semaphore, #tpu.memory_space<semaphore_mem>>) src(%40 : memref<16x128xf32, #tpu.memory_space<vmem>>) dst(%41 : memref<16x128xf32, #tpu.memory_space<any>>)
    } else {
    }
    %c1_i32_8 = arith.constant 1 : i32
    %17 = arith.addi %arg0, %c1_i32_8 : i32
    %c1_i32_9 = arith.constant 1 : i32
    %18 = arith.cmpi slt, %17, %c1_i32_9 : i32
    %19 = arith.extui %18 : i1 to i32
    %c0_i32_10 = arith.constant 0 : i32
    %20 = arith.cmpi ne, %19, %c0_i32_10 : i32
    scf.if %20 {
      %c1_i32_19 = arith.constant 1 : i32
      %36 = arith.addi %arg0, %c1_i32_19 : i32
      %c16_i32_20 = arith.constant 16 : i32
      %37 = arith.muli %36, %c16_i32_20 : i32
      %38 = tpu.assume_multiple %37, 16 : i32
      %c0_i32_21 = arith.constant 0 : i32
      %39 = arith.addi %38, %c0_i32_21 : i32
      %40 = arith.index_cast %39 : i32 to index
      %41 = memref.load %arg1[%40] : memref<16xi32, #tpu.memory_space<smem>>
      %c0_i32_22 = arith.constant 0 : i32
      %c0_i32_23 = arith.constant 0 : i32
      %42 = tpu.memref_slice %arg3[%41, %c0_i32_23] : memref<256x128xf32, #tpu.memory_space<any>> -> memref<1x128xf32, #tpu.memory_space<any>>
      %43 = tpu.memref_squeeze %42 : memref<1x128xf32, #tpu.memory_space<any>> -> memref<128xf32, #tpu.memory_space<any>>
      %c0_i32_24 = arith.constant 0 : i32
      %44 = tpu.memref_slice %arg5[%10, %c0_i32_22, %c0_i32_24] : memref<2x16x128xf32, #tpu.memory_space<vmem>> -> memref<1x1x128xf32, #tpu.memory_space<vmem>>
      %45 = tpu.memref_squeeze %44 : memref<1x1x128xf32, #tpu.memory_space<vmem>> -> memref<128xf32, #tpu.memory_space<vmem>>
      %46 = tpu.memref_slice %arg6[%10] : memref<2x!tpu.dma_semaphore, #tpu.memory_space<semaphore_mem>> -> memref<1x!tpu.dma_semaphore, #tpu.memory_space<semaphore_mem>>
      %47 = tpu.memref_squeeze %46 : memref<1x!tpu.dma_semaphore, #tpu.memory_space<semaphore_mem>> -> memref<!tpu.dma_semaphore, #tpu.memory_space<semaphore_mem>>
      tpu.enqueue_dma source(%43 : memref<128xf32, #tpu.memory_space<any>>) target(%45 : memref<128xf32, #tpu.memory_space<vmem>>) target_semaphore(%47 : memref<!tpu.dma_semaphore, #tpu.memory_space<semaphore_mem>>)
      %c1_i32_25 = arith.constant 1 : i32
      %48 = arith.addi %38, %c1_i32_25 : i32
      %49 = arith.index_cast %48 : i32 to index
      %50 = memref.load %arg1[%49] : memref<16xi32, #tpu.memory_space<smem>>
      %c1_i32_26 = arith.constant 1 : i32
      %c0_i32_27 = arith.constant 0 : i32
      %51 = tpu.memref_slice %arg3[%50, %c0_i32_27] : memref<256x128xf32, #tpu.memory_space<any>> -> memref<1x128xf32, #tpu.memory_space<any>>
      %52 = tpu.memref_squeeze %51 : memref<1x128xf32, #tpu.memory_space<any>> -> memref<128xf32, #tpu.memory_space<any>>
      %c0_i32_28 = arith.constant 0 : i32
      %53 = tpu.memref_slice %arg5[%10, %c1_i32_26, %c0_i32_28] : memref<2x16x128xf32, #tpu.memory_space<vmem>> -> memref<1x1x128xf32, #tpu.memory_space<vmem>>
      %54 = tpu.memref_squeeze %53 : memref<1x1x128xf32, #tpu.memory_space<vmem>> -> memref<128xf32, #tpu.memory_space<vmem>>
      %55 = tpu.memref_slice %arg6[%10] : memref<2x!tpu.dma_semaphore, #tpu.memory_space<semaphore_mem>> -> memref<1x!tpu.dma_semaphore, #tpu.memory_space<semaphore_mem>>
      %56 = tpu.memref_squeeze %55 : memref<1x!tpu.dma_semaphore, #tpu.memory_space<semaphore_mem>> -> memref<!tpu.dma_semaphore, #tpu.memory_space<semaphore_mem>>
      tpu.enqueue_dma source(%52 : memref<128xf32, #tpu.memory_space<any>>) target(%54 : memref<128xf32, #tpu.memory_space<vmem>>) target_semaphore(%56 : memref<!tpu.dma_semaphore, #tpu.memory_space<semaphore_mem>>)
      %c2_i32_29 = arith.constant 2 : i32
      %57 = arith.addi %38, %c2_i32_29 : i32
      %58 = arith.index_cast %57 : i32 to index
      %59 = memref.load %arg1[%58] : memref<16xi32, #tpu.memory_space<smem>>
      %c2_i32_30 = arith.constant 2 : i32
      %c0_i32_31 = arith.constant 0 : i32
      %60 = tpu.memref_slice %arg3[%59, %c0_i32_31] : memref<256x128xf32, #tpu.memory_space<any>> -> memref<1x128xf32, #tpu.memory_space<any>>
      %61 = tpu.memref_squeeze %60 : memref<1x128xf32, #tpu.memory_space<any>> -> memref<128xf32, #tpu.memory_space<any>>
      %c0_i32_32 = arith.constant 0 : i32
      %62 = tpu.memref_slice %arg5[%10, %c2_i32_30, %c0_i32_32] : memref<2x16x128xf32, #tpu.memory_space<vmem>> -> memref<1x1x128xf32, #tpu.memory_space<vmem>>
      %63 = tpu.memref_squeeze %62 : memref<1x1x128xf32, #tpu.memory_space<vmem>> -> memref<128xf32, #tpu.memory_space<vmem>>
      %64 = tpu.memref_slice %arg6[%10] : memref<2x!tpu.dma_semaphore, #tpu.memory_space<semaphore_mem>> -> memref<1x!tpu.dma_semaphore, #tpu.memory_space<semaphore_mem>>
      %65 = tpu.memref_squeeze %64 : memref<1x!tpu.dma_semaphore, #tpu.memory_space<semaphore_mem>> -> memref<!tpu.dma_semaphore, #tpu.memory_space<semaphore_mem>>
      tpu.enqueue_dma source(%61 : memref<128xf32, #tpu.memory_space<any>>) target(%63 : memref<128xf32, #tpu.memory_space<vmem>>) target_semaphore(%65 : memref<!tpu.dma_semaphore, #tpu.memory_space<semaphore_mem>>)
      %c3_i32 = arith.constant 3 : i32
      %66 = arith.addi %38, %c3_i32 : i32
      %67 = arith.index_cast %66 : i32 to index
      %68 = memref.load %arg1[%67] : memref<16xi32, #tpu.memory_space<smem>>
      %c3_i32_33 = arith.constant 3 : i32
      %c0_i32_34 = arith.constant 0 : i32
      %69 = tpu.memref_slice %arg3[%68, %c0_i32_34] : memref<256x128xf32, #tpu.memory_space<any>> -> memref<1x128xf32, #tpu.memory_space<any>>
      %70 = tpu.memref_squeeze %69 : memref<1x128xf32, #tpu.memory_space<any>> -> memref<128xf32, #tpu.memory_space<any>>
      %c0_i32_35 = arith.constant 0 : i32
      %71 = tpu.memref_slice %arg5[%10, %c3_i32_33, %c0_i32_35] : memref<2x16x128xf32, #tpu.memory_space<vmem>> -> memref<1x1x128xf32, #tpu.memory_space<vmem>>
      %72 = tpu.memref_squeeze %71 : memref<1x1x128xf32, #tpu.memory_space<vmem>> -> memref<128xf32, #tpu.memory_space<vmem>>
      %73 = tpu.memref_slice %arg6[%10] : memref<2x!tpu.dma_semaphore, #tpu.memory_space<semaphore_mem>> -> memref<1x!tpu.dma_semaphore, #tpu.memory_space<semaphore_mem>>
      %74 = tpu.memref_squeeze %73 : memref<1x!tpu.dma_semaphore, #tpu.memory_space<semaphore_mem>> -> memref<!tpu.dma_semaphore, #tpu.memory_space<semaphore_mem>>
      tpu.enqueue_dma source(%70 : memref<128xf32, #tpu.memory_space<any>>) target(%72 : memref<128xf32, #tpu.memory_space<vmem>>) target_semaphore(%74 : memref<!tpu.dma_semaphore, #tpu.memory_space<semaphore_mem>>)
      %c4_i32 = arith.constant 4 : i32
      %75 = arith.addi %38, %c4_i32 : i32
      %76 = arith.index_cast %75 : i32 to index
      %77 = memref.load %arg1[%76] : memref<16xi32, #tpu.memory_space<smem>>
      %c4_i32_36 = arith.constant 4 : i32
      %c0_i32_37 = arith.constant 0 : i32
      %78 = tpu.memref_slice %arg3[%77, %c0_i32_37] : memref<256x128xf32, #tpu.memory_space<any>> -> memref<1x128xf32, #tpu.memory_space<any>>
      %79 = tpu.memref_squeeze %78 : memref<1x128xf32, #tpu.memory_space<any>> -> memref<128xf32, #tpu.memory_space<any>>
      %c0_i32_38 = arith.constant 0 : i32
      %80 = tpu.memref_slice %arg5[%10, %c4_i32_36, %c0_i32_38] : memref<2x16x128xf32, #tpu.memory_space<vmem>> -> memref<1x1x128xf32, #tpu.memory_space<vmem>>
      %81 = tpu.memref_squeeze %80 : memref<1x1x128xf32, #tpu.memory_space<vmem>> -> memref<128xf32, #tpu.memory_space<vmem>>
      %82 = tpu.memref_slice %arg6[%10] : memref<2x!tpu.dma_semaphore, #tpu.memory_space<semaphore_mem>> -> memref<1x!tpu.dma_semaphore, #tpu.memory_space<semaphore_mem>>
      %83 = tpu.memref_squeeze %82 : memref<1x!tpu.dma_semaphore, #tpu.memory_space<semaphore_mem>> -> memref<!tpu.dma_semaphore, #tpu.memory_space<semaphore_mem>>
      tpu.enqueue_dma source(%79 : memref<128xf32, #tpu.memory_space<any>>) target(%81 : memref<128xf32, #tpu.memory_space<vmem>>) target_semaphore(%83 : memref<!tpu.dma_semaphore, #tpu.memory_space<semaphore_mem>>)
      %c5_i32 = arith.constant 5 : i32
      %84 = arith.addi %38, %c5_i32 : i32
      %85 = arith.index_cast %84 : i32 to index
      %86 = memref.load %arg1[%85] : memref<16xi32, #tpu.memory_space<smem>>
      %c5_i32_39 = arith.constant 5 : i32
      %c0_i32_40 = arith.constant 0 : i32
      %87 = tpu.memref_slice %arg3[%86, %c0_i32_40] : memref<256x128xf32, #tpu.memory_space<any>> -> memref<1x128xf32, #tpu.memory_space<any>>
      %88 = tpu.memref_squeeze %87 : memref<1x128xf32, #tpu.memory_space<any>> -> memref<128xf32, #tpu.memory_space<any>>
      %c0_i32_41 = arith.constant 0 : i32
      %89 = tpu.memref_slice %arg5[%10, %c5_i32_39, %c0_i32_41] : memref<2x16x128xf32, #tpu.memory_space<vmem>> -> memref<1x1x128xf32, #tpu.memory_space<vmem>>
      %90 = tpu.memref_squeeze %89 : memref<1x1x128xf32, #tpu.memory_space<vmem>> -> memref<128xf32, #tpu.memory_space<vmem>>
      %91 = tpu.memref_slice %arg6[%10] : memref<2x!tpu.dma_semaphore, #tpu.memory_space<semaphore_mem>> -> memref<1x!tpu.dma_semaphore, #tpu.memory_space<semaphore_mem>>
      %92 = tpu.memref_squeeze %91 : memref<1x!tpu.dma_semaphore, #tpu.memory_space<semaphore_mem>> -> memref<!tpu.dma_semaphore, #tpu.memory_space<semaphore_mem>>
      tpu.enqueue_dma source(%88 : memref<128xf32, #tpu.memory_space<any>>) target(%90 : memref<128xf32, #tpu.memory_space<vmem>>) target_semaphore(%92 : memref<!tpu.dma_semaphore, #tpu.memory_space<semaphore_mem>>)
      %c6_i32 = arith.constant 6 : i32
      %93 = arith.addi %38, %c6_i32 : i32
      %94 = arith.index_cast %93 : i32 to index
      %95 = memref.load %arg1[%94] : memref<16xi32, #tpu.memory_space<smem>>
      %c6_i32_42 = arith.constant 6 : i32
      %c0_i32_43 = arith.constant 0 : i32
      %96 = tpu.memref_slice %arg3[%95, %c0_i32_43] : memref<256x128xf32, #tpu.memory_space<any>> -> memref<1x128xf32, #tpu.memory_space<any>>
      %97 = tpu.memref_squeeze %96 : memref<1x128xf32, #tpu.memory_space<any>> -> memref<128xf32, #tpu.memory_space<any>>
      %c0_i32_44 = arith.constant 0 : i32
      %98 = tpu.memref_slice %arg5[%10, %c6_i32_42, %c0_i32_44] : memref<2x16x128xf32, #tpu.memory_space<vmem>> -> memref<1x1x128xf32, #tpu.memory_space<vmem>>
      %99 = tpu.memref_squeeze %98 : memref<1x1x128xf32, #tpu.memory_space<vmem>> -> memref<128xf32, #tpu.memory_space<vmem>>
      %100 = tpu.memref_slice %arg6[%10] : memref<2x!tpu.dma_semaphore, #tpu.memory_space<semaphore_mem>> -> memref<1x!tpu.dma_semaphore, #tpu.memory_space<semaphore_mem>>
      %101 = tpu.memref_squeeze %100 : memref<1x!tpu.dma_semaphore, #tpu.memory_space<semaphore_mem>> -> memref<!tpu.dma_semaphore, #tpu.memory_space<semaphore_mem>>
      tpu.enqueue_dma source(%97 : memref<128xf32, #tpu.memory_space<any>>) target(%99 : memref<128xf32, #tpu.memory_space<vmem>>) target_semaphore(%101 : memref<!tpu.dma_semaphore, #tpu.memory_space<semaphore_mem>>)
      %c7_i32 = arith.constant 7 : i32
      %102 = arith.addi %38, %c7_i32 : i32
      %103 = arith.index_cast %102 : i32 to index
      %104 = memref.load %arg1[%103] : memref<16xi32, #tpu.memory_space<smem>>
      %c7_i32_45 = arith.constant 7 : i32
      %c0_i32_46 = arith.constant 0 : i32
      %105 = tpu.memref_slice %arg3[%104, %c0_i32_46] : memref<256x128xf32, #tpu.memory_space<any>> -> memref<1x128xf32, #tpu.memory_space<any>>
      %106 = tpu.memref_squeeze %105 : memref<1x128xf32, #tpu.memory_space<any>> -> memref<128xf32, #tpu.memory_space<any>>
      %c0_i32_47 = arith.constant 0 : i32
      %107 = tpu.memref_slice %arg5[%10, %c7_i32_45, %c0_i32_47] : memref<2x16x128xf32, #tpu.memory_space<vmem>> -> memref<1x1x128xf32, #tpu.memory_space<vmem>>
      %108 = tpu.memref_squeeze %107 : memref<1x1x128xf32, #tpu.memory_space<vmem>> -> memref<128xf32, #tpu.memory_space<vmem>>
      %109 = tpu.memref_slice %arg6[%10] : memref<2x!tpu.dma_semaphore, #tpu.memory_space<semaphore_mem>> -> memref<1x!tpu.dma_semaphore, #tpu.memory_space<semaphore_mem>>
      %110 = tpu.memref_squeeze %109 : memref<1x!tpu.dma_semaphore, #tpu.memory_space<semaphore_mem>> -> memref<!tpu.dma_semaphore, #tpu.memory_space<semaphore_mem>>
      tpu.enqueue_dma source(%106 : memref<128xf32, #tpu.memory_space<any>>) target(%108 : memref<128xf32, #tpu.memory_space<vmem>>) target_semaphore(%110 : memref<!tpu.dma_semaphore, #tpu.memory_space<semaphore_mem>>)
      %c8_i32 = arith.constant 8 : i32
      %111 = arith.addi %38, %c8_i32 : i32
      %112 = arith.index_cast %111 : i32 to index
      %113 = memref.load %arg1[%112] : memref<16xi32, #tpu.memory_space<smem>>
      %c8_i32_48 = arith.constant 8 : i32
      %c0_i32_49 = arith.constant 0 : i32
      %114 = tpu.memref_slice %arg3[%113, %c0_i32_49] : memref<256x128xf32, #tpu.memory_space<any>> -> memref<1x128xf32, #tpu.memory_space<any>>
      %115 = tpu.memref_squeeze %114 : memref<1x128xf32, #tpu.memory_space<any>> -> memref<128xf32, #tpu.memory_space<any>>
      %c0_i32_50 = arith.constant 0 : i32
      %116 = tpu.memref_slice %arg5[%10, %c8_i32_48, %c0_i32_50] : memref<2x16x128xf32, #tpu.memory_space<vmem>> -> memref<1x1x128xf32, #tpu.memory_space<vmem>>
      %117 = tpu.memref_squeeze %116 : memref<1x1x128xf32, #tpu.memory_space<vmem>> -> memref<128xf32, #tpu.memory_space<vmem>>
      %118 = tpu.memref_slice %arg6[%10] : memref<2x!tpu.dma_semaphore, #tpu.memory_space<semaphore_mem>> -> memref<1x!tpu.dma_semaphore, #tpu.memory_space<semaphore_mem>>
      %119 = tpu.memref_squeeze %118 : memref<1x!tpu.dma_semaphore, #tpu.memory_space<semaphore_mem>> -> memref<!tpu.dma_semaphore, #tpu.memory_space<semaphore_mem>>
      tpu.enqueue_dma source(%115 : memref<128xf32, #tpu.memory_space<any>>) target(%117 : memref<128xf32, #tpu.memory_space<vmem>>) target_semaphore(%119 : memref<!tpu.dma_semaphore, #tpu.memory_space<semaphore_mem>>)
      %c9_i32 = arith.constant 9 : i32
      %120 = arith.addi %38, %c9_i32 : i32
      %121 = arith.index_cast %120 : i32 to index
      %122 = memref.load %arg1[%121] : memref<16xi32, #tpu.memory_space<smem>>
      %c9_i32_51 = arith.constant 9 : i32
      %c0_i32_52 = arith.constant 0 : i32
      %123 = tpu.memref_slice %arg3[%122, %c0_i32_52] : memref<256x128xf32, #tpu.memory_space<any>> -> memref<1x128xf32, #tpu.memory_space<any>>
      %124 = tpu.memref_squeeze %123 : memref<1x128xf32, #tpu.memory_space<any>> -> memref<128xf32, #tpu.memory_space<any>>
      %c0_i32_53 = arith.constant 0 : i32
      %125 = tpu.memref_slice %arg5[%10, %c9_i32_51, %c0_i32_53] : memref<2x16x128xf32, #tpu.memory_space<vmem>> -> memref<1x1x128xf32, #tpu.memory_space<vmem>>
      %126 = tpu.memref_squeeze %125 : memref<1x1x128xf32, #tpu.memory_space<vmem>> -> memref<128xf32, #tpu.memory_space<vmem>>
      %127 = tpu.memref_slice %arg6[%10] : memref<2x!tpu.dma_semaphore, #tpu.memory_space<semaphore_mem>> -> memref<1x!tpu.dma_semaphore, #tpu.memory_space<semaphore_mem>>
      %128 = tpu.memref_squeeze %127 : memref<1x!tpu.dma_semaphore, #tpu.memory_space<semaphore_mem>> -> memref<!tpu.dma_semaphore, #tpu.memory_space<semaphore_mem>>
      tpu.enqueue_dma source(%124 : memref<128xf32, #tpu.memory_space<any>>) target(%126 : memref<128xf32, #tpu.memory_space<vmem>>) target_semaphore(%128 : memref<!tpu.dma_semaphore, #tpu.memory_space<semaphore_mem>>)
      %c10_i32 = arith.constant 10 : i32
      %129 = arith.addi %38, %c10_i32 : i32
      %130 = arith.index_cast %129 : i32 to index
      %131 = memref.load %arg1[%130] : memref<16xi32, #tpu.memory_space<smem>>
      %c10_i32_54 = arith.constant 10 : i32
      %c0_i32_55 = arith.constant 0 : i32
      %132 = tpu.memref_slice %arg3[%131, %c0_i32_55] : memref<256x128xf32, #tpu.memory_space<any>> -> memref<1x128xf32, #tpu.memory_space<any>>
      %133 = tpu.memref_squeeze %132 : memref<1x128xf32, #tpu.memory_space<any>> -> memref<128xf32, #tpu.memory_space<any>>
      %c0_i32_56 = arith.constant 0 : i32
      %134 = tpu.memref_slice %arg5[%10, %c10_i32_54, %c0_i32_56] : memref<2x16x128xf32, #tpu.memory_space<vmem>> -> memref<1x1x128xf32, #tpu.memory_space<vmem>>
      %135 = tpu.memref_squeeze %134 : memref<1x1x128xf32, #tpu.memory_space<vmem>> -> memref<128xf32, #tpu.memory_space<vmem>>
      %136 = tpu.memref_slice %arg6[%10] : memref<2x!tpu.dma_semaphore, #tpu.memory_space<semaphore_mem>> -> memref<1x!tpu.dma_semaphore, #tpu.memory_space<semaphore_mem>>
      %137 = tpu.memref_squeeze %136 : memref<1x!tpu.dma_semaphore, #tpu.memory_space<semaphore_mem>> -> memref<!tpu.dma_semaphore, #tpu.memory_space<semaphore_mem>>
      tpu.enqueue_dma source(%133 : memref<128xf32, #tpu.memory_space<any>>) target(%135 : memref<128xf32, #tpu.memory_space<vmem>>) target_semaphore(%137 : memref<!tpu.dma_semaphore, #tpu.memory_space<semaphore_mem>>)
      %c11_i32 = arith.constant 11 : i32
      %138 = arith.addi %38, %c11_i32 : i32
      %139 = arith.index_cast %138 : i32 to index
      %140 = memref.load %arg1[%139] : memref<16xi32, #tpu.memory_space<smem>>
      %c11_i32_57 = arith.constant 11 : i32
      %c0_i32_58 = arith.constant 0 : i32
      %141 = tpu.memref_slice %arg3[%140, %c0_i32_58] : memref<256x128xf32, #tpu.memory_space<any>> -> memref<1x128xf32, #tpu.memory_space<any>>
      %142 = tpu.memref_squeeze %141 : memref<1x128xf32, #tpu.memory_space<any>> -> memref<128xf32, #tpu.memory_space<any>>
      %c0_i32_59 = arith.constant 0 : i32
      %143 = tpu.memref_slice %arg5[%10, %c11_i32_57, %c0_i32_59] : memref<2x16x128xf32, #tpu.memory_space<vmem>> -> memref<1x1x128xf32, #tpu.memory_space<vmem>>
      %144 = tpu.memref_squeeze %143 : memref<1x1x128xf32, #tpu.memory_space<vmem>> -> memref<128xf32, #tpu.memory_space<vmem>>
      %145 = tpu.memref_slice %arg6[%10] : memref<2x!tpu.dma_semaphore, #tpu.memory_space<semaphore_mem>> -> memref<1x!tpu.dma_semaphore, #tpu.memory_space<semaphore_mem>>
      %146 = tpu.memref_squeeze %145 : memref<1x!tpu.dma_semaphore, #tpu.memory_space<semaphore_mem>> -> memref<!tpu.dma_semaphore, #tpu.memory_space<semaphore_mem>>
      tpu.enqueue_dma source(%142 : memref<128xf32, #tpu.memory_space<any>>) target(%144 : memref<128xf32, #tpu.memory_space<vmem>>) target_semaphore(%146 : memref<!tpu.dma_semaphore, #tpu.memory_space<semaphore_mem>>)
      %c12_i32 = arith.constant 12 : i32
      %147 = arith.addi %38, %c12_i32 : i32
      %148 = arith.index_cast %147 : i32 to index
      %149 = memref.load %arg1[%148] : memref<16xi32, #tpu.memory_space<smem>>
      %c12_i32_60 = arith.constant 12 : i32
      %c0_i32_61 = arith.constant 0 : i32
      %150 = tpu.memref_slice %arg3[%149, %c0_i32_61] : memref<256x128xf32, #tpu.memory_space<any>> -> memref<1x128xf32, #tpu.memory_space<any>>
      %151 = tpu.memref_squeeze %150 : memref<1x128xf32, #tpu.memory_space<any>> -> memref<128xf32, #tpu.memory_space<any>>
      %c0_i32_62 = arith.constant 0 : i32
      %152 = tpu.memref_slice %arg5[%10, %c12_i32_60, %c0_i32_62] : memref<2x16x128xf32, #tpu.memory_space<vmem>> -> memref<1x1x128xf32, #tpu.memory_space<vmem>>
      %153 = tpu.memref_squeeze %152 : memref<1x1x128xf32, #tpu.memory_space<vmem>> -> memref<128xf32, #tpu.memory_space<vmem>>
      %154 = tpu.memref_slice %arg6[%10] : memref<2x!tpu.dma_semaphore, #tpu.memory_space<semaphore_mem>> -> memref<1x!tpu.dma_semaphore, #tpu.memory_space<semaphore_mem>>
      %155 = tpu.memref_squeeze %154 : memref<1x!tpu.dma_semaphore, #tpu.memory_space<semaphore_mem>> -> memref<!tpu.dma_semaphore, #tpu.memory_space<semaphore_mem>>
      tpu.enqueue_dma source(%151 : memref<128xf32, #tpu.memory_space<any>>) target(%153 : memref<128xf32, #tpu.memory_space<vmem>>) target_semaphore(%155 : memref<!tpu.dma_semaphore, #tpu.memory_space<semaphore_mem>>)
      %c13_i32 = arith.constant 13 : i32
      %156 = arith.addi %38, %c13_i32 : i32
      %157 = arith.index_cast %156 : i32 to index
      %158 = memref.load %arg1[%157] : memref<16xi32, #tpu.memory_space<smem>>
      %c13_i32_63 = arith.constant 13 : i32
      %c0_i32_64 = arith.constant 0 : i32
      %159 = tpu.memref_slice %arg3[%158, %c0_i32_64] : memref<256x128xf32, #tpu.memory_space<any>> -> memref<1x128xf32, #tpu.memory_space<any>>
      %160 = tpu.memref_squeeze %159 : memref<1x128xf32, #tpu.memory_space<any>> -> memref<128xf32, #tpu.memory_space<any>>
      %c0_i32_65 = arith.constant 0 : i32
      %161 = tpu.memref_slice %arg5[%10, %c13_i32_63, %c0_i32_65] : memref<2x16x128xf32, #tpu.memory_space<vmem>> -> memref<1x1x128xf32, #tpu.memory_space<vmem>>
      %162 = tpu.memref_squeeze %161 : memref<1x1x128xf32, #tpu.memory_space<vmem>> -> memref<128xf32, #tpu.memory_space<vmem>>
      %163 = tpu.memref_slice %arg6[%10] : memref<2x!tpu.dma_semaphore, #tpu.memory_space<semaphore_mem>> -> memref<1x!tpu.dma_semaphore, #tpu.memory_space<semaphore_mem>>
      %164 = tpu.memref_squeeze %163 : memref<1x!tpu.dma_semaphore, #tpu.memory_space<semaphore_mem>> -> memref<!tpu.dma_semaphore, #tpu.memory_space<semaphore_mem>>
      tpu.enqueue_dma source(%160 : memref<128xf32, #tpu.memory_space<any>>) target(%162 : memref<128xf32, #tpu.memory_space<vmem>>) target_semaphore(%164 : memref<!tpu.dma_semaphore, #tpu.memory_space<semaphore_mem>>)
      %c14_i32 = arith.constant 14 : i32
      %165 = arith.addi %38, %c14_i32 : i32
      %166 = arith.index_cast %165 : i32 to index
      %167 = memref.load %arg1[%166] : memref<16xi32, #tpu.memory_space<smem>>
      %c14_i32_66 = arith.constant 14 : i32
      %c0_i32_67 = arith.constant 0 : i32
      %168 = tpu.memref_slice %arg3[%167, %c0_i32_67] : memref<256x128xf32, #tpu.memory_space<any>> -> memref<1x128xf32, #tpu.memory_space<any>>
      %169 = tpu.memref_squeeze %168 : memref<1x128xf32, #tpu.memory_space<any>> -> memref<128xf32, #tpu.memory_space<any>>
      %c0_i32_68 = arith.constant 0 : i32
      %170 = tpu.memref_slice %arg5[%10, %c14_i32_66, %c0_i32_68] : memref<2x16x128xf32, #tpu.memory_space<vmem>> -> memref<1x1x128xf32, #tpu.memory_space<vmem>>
      %171 = tpu.memref_squeeze %170 : memref<1x1x128xf32, #tpu.memory_space<vmem>> -> memref<128xf32, #tpu.memory_space<vmem>>
      %172 = tpu.memref_slice %arg6[%10] : memref<2x!tpu.dma_semaphore, #tpu.memory_space<semaphore_mem>> -> memref<1x!tpu.dma_semaphore, #tpu.memory_space<semaphore_mem>>
      %173 = tpu.memref_squeeze %172 : memref<1x!tpu.dma_semaphore, #tpu.memory_space<semaphore_mem>> -> memref<!tpu.dma_semaphore, #tpu.memory_space<semaphore_mem>>
      tpu.enqueue_dma source(%169 : memref<128xf32, #tpu.memory_space<any>>) target(%171 : memref<128xf32, #tpu.memory_space<vmem>>) target_semaphore(%173 : memref<!tpu.dma_semaphore, #tpu.memory_space<semaphore_mem>>)
      %c15_i32 = arith.constant 15 : i32
      %174 = arith.addi %38, %c15_i32 : i32
      %175 = arith.index_cast %174 : i32 to index
      %176 = memref.load %arg1[%175] : memref<16xi32, #tpu.memory_space<smem>>
      %c15_i32_69 = arith.constant 15 : i32
      %c0_i32_70 = arith.constant 0 : i32
      %177 = tpu.memref_slice %arg3[%176, %c0_i32_70] : memref<256x128xf32, #tpu.memory_space<any>> -> memref<1x128xf32, #tpu.memory_space<any>>
      %178 = tpu.memref_squeeze %177 : memref<1x128xf32, #tpu.memory_space<any>> -> memref<128xf32, #tpu.memory_space<any>>
      %c0_i32_71 = arith.constant 0 : i32
      %179 = tpu.memref_slice %arg5[%10, %c15_i32_69, %c0_i32_71] : memref<2x16x128xf32, #tpu.memory_space<vmem>> -> memref<1x1x128xf32, #tpu.memory_space<vmem>>
      %180 = tpu.memref_squeeze %179 : memref<1x1x128xf32, #tpu.memory_space<vmem>> -> memref<128xf32, #tpu.memory_space<vmem>>
      %181 = tpu.memref_slice %arg6[%10] : memref<2x!tpu.dma_semaphore, #tpu.memory_space<semaphore_mem>> -> memref<1x!tpu.dma_semaphore, #tpu.memory_space<semaphore_mem>>
      %182 = tpu.memref_squeeze %181 : memref<1x!tpu.dma_semaphore, #tpu.memory_space<semaphore_mem>> -> memref<!tpu.dma_semaphore, #tpu.memory_space<semaphore_mem>>
      tpu.enqueue_dma source(%178 : memref<128xf32, #tpu.memory_space<any>>) target(%180 : memref<128xf32, #tpu.memory_space<vmem>>) target_semaphore(%182 : memref<!tpu.dma_semaphore, #tpu.memory_space<semaphore_mem>>)
    } else {
    }
    %c16_i32 = arith.constant 16 : i32
    %21 = arith.muli %arg0, %c16_i32 : i32
    %22 = tpu.assume_multiple %21, 16 : i32
    %c0_i32_11 = arith.constant 0 : i32
    %23 = tpu.memref_slice %arg4[%22, %c0_i32_11] : memref<16x128xf32, #tpu.memory_space<any>> -> memref<16x128xf32, #tpu.memory_space<any>>
    %c0_i32_12 = arith.constant 0 : i32
    %c0_i32_13 = arith.constant 0 : i32
    %24 = tpu.memref_slice %arg5[%9, %c0_i32_12, %c0_i32_13] : memref<2x16x128xf32, #tpu.memory_space<vmem>> -> memref<1x16x128xf32, #tpu.memory_space<vmem>>
    %25 = tpu.memref_squeeze %24 : memref<1x16x128xf32, #tpu.memory_space<vmem>> -> memref<16x128xf32, #tpu.memory_space<vmem>>
    %26 = tpu.memref_slice %arg6[%9] : memref<2x!tpu.dma_semaphore, #tpu.memory_space<semaphore_mem>> -> memref<1x!tpu.dma_semaphore, #tpu.memory_space<semaphore_mem>>
    %27 = tpu.memref_squeeze %26 : memref<1x!tpu.dma_semaphore, #tpu.memory_space<semaphore_mem>> -> memref<!tpu.dma_semaphore, #tpu.memory_space<semaphore_mem>>
    tpu.wait_dma2 semaphore(%27 : memref<!tpu.dma_semaphore, #tpu.memory_space<semaphore_mem>>) src(%23 : memref<16x128xf32, #tpu.memory_space<any>>) dst(%25 : memref<16x128xf32, #tpu.memory_space<vmem>>)
    %c0_i32_14 = arith.constant 0 : i32
    %c0_i32_15 = arith.constant 0 : i32
    %28 = tpu.memref_slice %arg5[%9, %c0_i32_14, %c0_i32_15] : memref<2x16x128xf32, #tpu.memory_space<vmem>> -> memref<1x16x128xf32, #tpu.memory_space<vmem>>
    %29 = tpu.memref_squeeze %28 : memref<1x16x128xf32, #tpu.memory_space<vmem>> -> memref<16x128xf32, #tpu.memory_space<vmem>>
    %c0_i32_16 = arith.constant 0 : i32
    %30 = tpu.memref_slice %arg4[%22, %c0_i32_16] : memref<16x128xf32, #tpu.memory_space<any>> -> memref<16x128xf32, #tpu.memory_space<any>>
    %31 = tpu.memref_slice %arg7[%9] : memref<2x!tpu.dma_semaphore, #tpu.memory_space<semaphore_mem>> -> memref<1x!tpu.dma_semaphore, #tpu.memory_space<semaphore_mem>>
    %32 = tpu.memref_squeeze %31 : memref<1x!tpu.dma_semaphore, #tpu.memory_space<semaphore_mem>> -> memref<!tpu.dma_semaphore, #tpu.memory_space<semaphore_mem>>
    tpu.enqueue_dma source(%29 : memref<16x128xf32, #tpu.memory_space<vmem>>) target(%30 : memref<16x128xf32, #tpu.memory_space<any>>) target_semaphore(%32 : memref<!tpu.dma_semaphore, #tpu.memory_space<semaphore_mem>>)
    %c0_i32_17 = arith.constant 0 : i32
    %33 = arith.cmpi eq, %arg0, %c0_i32_17 : i32
    %34 = arith.extui %33 : i1 to i32
    %c0_i32_18 = arith.constant 0 : i32
    %35 = arith.cmpi ne, %34, %c0_i32_18 : i32
    scf.if %35 {
      %c0_i32_19 = arith.constant 0 : i32
      %c0_i32_20 = arith.constant 0 : i32
      %36 = tpu.memref_slice %arg5[%9, %c0_i32_19, %c0_i32_20] : memref<2x16x128xf32, #tpu.memory_space<vmem>> -> memref<1x16x128xf32, #tpu.memory_space<vmem>>
      %37 = tpu.memref_squeeze %36 : memref<1x16x128xf32, #tpu.memory_space<vmem>> -> memref<16x128xf32, #tpu.memory_space<vmem>>
      %c0_i32_21 = arith.constant 0 : i32
      %38 = tpu.memref_slice %arg4[%22, %c0_i32_21] : memref<16x128xf32, #tpu.memory_space<any>> -> memref<16x128xf32, #tpu.memory_space<any>>
      %39 = tpu.memref_slice %arg7[%9] : memref<2x!tpu.dma_semaphore, #tpu.memory_space<semaphore_mem>> -> memref<1x!tpu.dma_semaphore, #tpu.memory_space<semaphore_mem>>
      %40 = tpu.memref_squeeze %39 : memref<1x!tpu.dma_semaphore, #tpu.memory_space<semaphore_mem>> -> memref<!tpu.dma_semaphore, #tpu.memory_space<semaphore_mem>>
      tpu.wait_dma2 semaphore(%40 : memref<!tpu.dma_semaphore, #tpu.memory_space<semaphore_mem>>) src(%37 : memref<16x128xf32, #tpu.memory_space<vmem>>) dst(%38 : memref<16x128xf32, #tpu.memory_space<any>>)
    } else {
    }
    return
  }
  func.func @transform_0(%arg0: i32, %arg1: memref<16xi32, #tpu.memory_space<smem>>) -> i32 {
    %c0_i32 = arith.constant 0 : i32
    %c0_i32_0 = arith.constant 0 : i32
    return %c0_i32 : i32
  }
}

</mosaic_0001>

<llo_original>
// kernel: embedding_forward.1
$region0: #{embedding_forward.1}
  #allocation0 [shape = 'u32[]', space=smem, size = 0x4, offset = 0x4, fixed_abs, tag = 'smem constant byte address 0x4 - core index']
  #allocation1 [shape = 'u32[72,128]{1,0:T(1,128)}', space=vmem, size = 0x9000, scoped, tag = 'internal scratch']
  #allocation2 [shape = 'f32[2,16,128]{2,1,0:T(8,128)}', space=vmem, size = 0x4000, scoped, tag = 'scratch operand']
  #allocation3 [shape = 's32[2]{0}', space=sflag, size = 0x8, scoped, tag = 'scratch operand']
  #allocation4 [shape = 's32[2]{0}', space=sflag, size = 0x8, scoped, tag = 'scratch operand']
  #allocation5 [shape = 's32[1]{0}', space=sflag, size = 0x4, scoped, tag = 'scoped memory for embedding_forward.1']
  #allocation6 [shape = 'u8[512]{0}', space=smem, size = 0x200, scoped, tag = 'prefetched SMEM operand 0']
  #allocation7 [shape = 'f32[1]{0:T(128)S(6)}', space=smem, size = 0x200, scoped, tag = 'scoped memory for embedding_forward.1']
  #allocation8 [shape = 's32[]', space=sflag, size = 0x4, offset = 0, fixed_abs, tag = 'sflag constant byte address 0x0 - dummy sync flag']
  #allocation9 [shape = 's32[]', space=sflag, size = 0x4, offset = 0, fixed_abs, tag = 'sflag constant byte address 0x0 - dummy sync flag']
  #allocation10 [shape = 'u32[]', space=smem, size = 0x4, offset = 0x44, fixed_abs, tag = 'smem constant byte address 0x44 - assertion arg 0']
  #allocation11 [shape = 'u32[]', space=smem, size = 0x4, offset = 0x48, fixed_abs, tag = 'smem constant byte address 0x48 - assertion arg 1']
  #allocation12 [shape = 's32[]', space=sflag, size = 0x4, offset = 0, fixed_abs, tag = 'sflag constant byte address 0x0 - dummy sync flag']
  #allocation13 [shape = 's32[]', space=sflag, size = 0x4, offset = 0, fixed_abs, tag = 'sflag constant byte address 0x0 - dummy sync flag']
  #allocation14 [shape = 's32[]', space=sflag, size = 0x4, offset = 0, fixed_abs, tag = 'sflag constant byte address 0x0 - dummy sync flag']
  #allocation15 [shape = 's32[]', space=sflag, size = 0x4, offset = 0, fixed_abs, tag = 'sflag constant byte address 0x0 - dummy sync flag']
  #allocation16 [shape = 's32[]', space=sflag, size = 0x4, offset = 0, fixed_abs, tag = 'sflag constant byte address 0x0 - dummy sync flag']
  #allocation17 [shape = 's32[]', space=sflag, size = 0x4, offset = 0, fixed_abs, tag = 'sflag constant byte address 0x0 - dummy sync flag']
  #allocation18 [shape = 's32[]', space=sflag, size = 0x4, offset = 0, fixed_abs, tag = 'sflag constant byte address 0x0 - dummy sync flag']
  #allocation19 [shape = 's32[]', space=sflag, size = 0x4, offset = 0, fixed_abs, tag = 'sflag constant byte address 0x0 - dummy sync flag']
  #allocation20 [shape = 's32[]', space=sflag, size = 0x4, offset = 0, fixed_abs, tag = 'sflag constant byte address 0x0 - dummy sync flag']
  #allocation21 [shape = 's32[]', space=sflag, size = 0x4, offset = 0, fixed_abs, tag = 'sflag constant byte address 0x0 - dummy sync flag']
  #allocation22 [shape = 's32[]', space=sflag, size = 0x4, offset = 0, fixed_abs, tag = 'sflag constant byte address 0x0 - dummy sync flag']
  #allocation23 [shape = 's32[]', space=sflag, size = 0x4, offset = 0, fixed_abs, tag = 'sflag constant byte address 0x0 - dummy sync flag']
  #allocation24 [shape = 's32[]', space=sflag, size = 0x4, offset = 0, fixed_abs, tag = 'sflag constant byte address 0x0 - dummy sync flag']
  #allocation25 [shape = 's32[]', space=sflag, size = 0x4, offset = 0, fixed_abs, tag = 'sflag constant byte address 0x0 - dummy sync flag']
  #allocation26 [shape = 's32[]', space=sflag, size = 0x4, offset = 0, fixed_abs, tag = 'sflag constant byte address 0x0 - dummy sync flag']
  #allocation27 [shape = 's32[]', space=sflag, size = 0x4, offset = 0, fixed_abs, tag = 'sflag constant byte address 0x0 - dummy sync flag']
  #allocation28 [shape = 's32[]', space=sflag, size = 0x4, offset = 0, fixed_abs, tag = 'sflag constant byte address 0x0 - dummy sync flag']
  #allocation29 [shape = 's32[]', space=sflag, size = 0x4, offset = 0, fixed_abs, tag = 'sflag constant byte address 0x0 - dummy sync flag']
  #allocation30 [shape = 's32[]', space=sflag, size = 0x4, offset = 0, fixed_abs, tag = 'sflag constant byte address 0x0 - dummy sync flag']
  #allocation31 [shape = 's32[]', space=sflag, size = 0x4, offset = 0, fixed_abs, tag = 'sflag constant byte address 0x0 - dummy sync flag']
  #allocation32 [shape = 's32[]', space=sflag, size = 0x4, offset = 0, fixed_abs, tag = 'sflag constant byte address 0x0 - dummy sync flag']
  #allocation33 [shape = 's32[]', space=sflag, size = 0x4, offset = 0, fixed_abs, tag = 'sflag constant byte address 0x0 - dummy sync flag']
  #allocation34 [shape = 's32[]', space=sflag, size = 0x4, offset = 0, fixed_abs, tag = 'sflag constant byte address 0x0 - dummy sync flag']
  #allocation35 [shape = 's32[]', space=sflag, size = 0x4, offset = 0, fixed_abs, tag = 'sflag constant byte address 0x0 - dummy sync flag']
  #allocation36 [shape = 's32[]', space=sflag, size = 0x4, offset = 0, fixed_abs, tag = 'sflag constant byte address 0x0 - dummy sync flag']
  #allocation37 [shape = 's32[]', space=sflag, size = 0x4, offset = 0, fixed_abs, tag = 'sflag constant byte address 0x0 - dummy sync flag']
  #allocation38 [shape = 's32[]', space=sflag, size = 0x4, offset = 0, fixed_abs, tag = 'sflag constant byte address 0x0 - dummy sync flag']
  #allocation39 [shape = 's32[]', space=sflag, size = 0x4, offset = 0, fixed_abs, tag = 'sflag constant byte address 0x0 - dummy sync flag']
  #allocation40 [shape = 's32[]', space=sflag, size = 0x4, offset = 0, fixed_abs, tag = 'sflag constant byte address 0x0 - dummy sync flag']
  #allocation41 [shape = 's32[]', space=sflag, size = 0x4, offset = 0, fixed_abs, tag = 'sflag constant byte address 0x0 - dummy sync flag']
  #allocation42 [shape = 's32[]', space=sflag, size = 0x4, offset = 0, fixed_abs, tag = 'sflag constant byte address 0x0 - dummy sync flag']
  #allocation43 [shape = 's32[]', space=sflag, size = 0x4, offset = 0, fixed_abs, tag = 'sflag constant byte address 0x0 - dummy sync flag']
  #allocation44 [shape = 's32[]', space=sflag, size = 0x4, offset = 0, fixed_abs, tag = 'sflag constant byte address 0x0 - dummy sync flag']
  #allocation45 [shape = 's32[]', space=sflag, size = 0x4, offset = 0, fixed_abs, tag = 'sflag constant byte address 0x0 - dummy sync flag']
  #allocation46 [shape = 's32[]', space=sflag, size = 0x4, offset = 0, fixed_abs, tag = 'sflag constant byte address 0x0 - dummy sync flag']
  #allocation47 [shape = 's32[]', space=sflag, size = 0x4, offset = 0, fixed_abs, tag = 'sflag constant byte address 0x0 - dummy sync flag']
  #allocation48 [shape = 's32[]', space=sflag, size = 0x4, offset = 0, fixed_abs, tag = 'sflag constant byte address 0x0 - dummy sync flag']
  #allocation49 [shape = 's32[]', space=sflag, size = 0x4, offset = 0, fixed_abs, tag = 'sflag constant byte address 0x0 - dummy sync flag']
  #allocation50 [shape = 's32[]', space=sflag, size = 0x4, offset = 0, fixed_abs, tag = 'sflag constant byte address 0x0 - dummy sync flag']
  #allocation51 [shape = 's32[]', space=sflag, size = 0x4, offset = 0, fixed_abs, tag = 'sflag constant byte address 0x0 - dummy sync flag']
  #allocation52 [shape = 's32[]', space=sflag, size = 0x4, offset = 0, fixed_abs, tag = 'sflag constant byte address 0x0 - dummy sync flag']
  #allocation53 [shape = 's32[]', space=sflag, size = 0x4, offset = 0, fixed_abs, tag = 'sflag constant byte address 0x0 - dummy sync flag']
  #allocation54 [shape = 's32[]', space=sflag, size = 0x4, offset = 0, fixed_abs, tag = 'sflag constant byte address 0x0 - dummy sync flag']
  #allocation55 [shape = 's32[]', space=sflag, size = 0x4, offset = 0, fixed_abs, tag = 'sflag constant byte address 0x0 - dummy sync flag']
  #allocation56 [shape = 's32[]', space=sflag, size = 0x4, offset = 0, fixed_abs, tag = 'sflag constant byte address 0x0 - dummy sync flag']
  #allocation57 [shape = 's32[]', space=sflag, size = 0x4, offset = 0, fixed_abs, tag = 'sflag constant byte address 0x0 - dummy sync flag']
  #allocation58 [shape = 's32[]', space=sflag, size = 0x4, offset = 0, fixed_abs, tag = 'sflag constant byte address 0x0 - dummy sync flag']
  #allocation59 [shape = 's32[]', space=sflag, size = 0x4, offset = 0, fixed_abs, tag = 'sflag constant byte address 0x0 - dummy sync flag']
  #allocation60 [shape = 's32[]', space=sflag, size = 0x4, offset = 0, fixed_abs, tag = 'sflag constant byte address 0x0 - dummy sync flag']
  #allocation61 [shape = 's32[]', space=sflag, size = 0x4, offset = 0, fixed_abs, tag = 'sflag constant byte address 0x0 - dummy sync flag']
  #allocation62 [shape = 's32[]', space=sflag, size = 0x4, offset = 0, fixed_abs, tag = 'sflag constant byte address 0x0 - dummy sync flag']
  #allocation63 [shape = 's32[]', space=sflag, size = 0x4, offset = 0, fixed_abs, tag = 'sflag constant byte address 0x0 - dummy sync flag']
  #allocation64 [shape = 's32[]', space=sflag, size = 0x4, offset = 0, fixed_abs, tag = 'sflag constant byte address 0x0 - dummy sync flag']
  #allocation65 [shape = 's32[]', space=sflag, size = 0x4, offset = 0, fixed_abs, tag = 'sflag constant byte address 0x0 - dummy sync flag']
  #allocation66 [shape = 's32[]', space=sflag, size = 0x4, offset = 0, fixed_abs, tag = 'sflag constant byte address 0x0 - dummy sync flag']
  #allocation67 [shape = 's32[]', space=sflag, size = 0x4, offset = 0, fixed_abs, tag = 'sflag constant byte address 0x0 - dummy sync flag']
  #allocation68 [shape = 's32[]', space=sflag, size = 0x4, offset = 0, fixed_abs, tag = 'sflag constant byte address 0x0 - dummy sync flag']
  #allocation69 [shape = 's32[]', space=sflag, size = 0x4, offset = 0, fixed_abs, tag = 'sflag constant byte address 0x0 - dummy sync flag']
  #allocation70 [shape = 's32[]', space=sflag, size = 0x4, offset = 0, fixed_abs, tag = 'sflag constant byte address 0x0 - dummy sync flag']
  #allocation71 [shape = 's32[]', space=sflag, size = 0x4, offset = 0, fixed_abs, tag = 'sflag constant byte address 0x0 - dummy sync flag']
  #allocation72 [shape = 's32[]', space=sflag, size = 0x4, offset = 0, fixed_abs, tag = 'sflag constant byte address 0x0 - dummy sync flag']
  #allocation73 [shape = 's32[]', space=sflag, size = 0x4, offset = 0, fixed_abs, tag = 'sflag constant byte address 0x0 - dummy sync flag']
  #allocation74 [shape = 's32[]', space=sflag, size = 0x4, offset = 0, fixed_abs, tag = 'sflag constant byte address 0x0 - dummy sync flag']
  #allocation75 [shape = 's32[]', space=sflag, size = 0x4, offset = 0, fixed_abs, tag = 'sflag constant byte address 0x0 - dummy sync flag']
  %s0 = inlined_call_operand.vmem [shape: s32[16], index: 0, kind: input, shape index: {}]
  %s1 = inlined_call_operand.<no memory space> [shape: f32[1], index: 1, kind: input, shape index: {}]
  %s2 = inlined_call_operand.hbm [shape: f32[256,128], index: 2, kind: input, shape index: {}]
  %s3 = inlined_call_operand.hbm [shape: f32[16,128], index: 3, kind: output, shape index: {}]
  %s4 = sld [smem:[#allocation0]]
  $region154: #{embedding_forward.1} parent=0
    _
  %s6 = ssub.s32 1, %s4
  %s7 = scalar_select 0, %s6, %s4
  %s9 = sshll.u32 %s0, 4
  %s10 = int_to_ptr.vmem [resolvable:$true] %s9
  %12 = dma.vmem_to_smem %s10, 16, [#allocation6], [#allocation5]
  %13 = sst [smem:[#allocation7]] %s1
  %15 = dma.done [#allocation5], 16
  %16 = sfence
  // Predicated region
  $region2: #{embedding_forward.1} parent=0 // pred_check
    _
  $region3: #{embedding_forward.1} parent=0 // pred_check_branch
    %18 = sbr.rel (0) target = $region5
  $region4: #{embedding_forward.1} parent=0 // pred_region
    _
  $region5: #{embedding_forward.1} parent=0 // pred_fallthru
    _
  %s19 = ssub.s32 0, 0
  %s20 = ssub.s32 0, 0
  %p21 = scmp.ne.s32.totalorder 0, 0
  %p22 = scmp.lt.s32.totalorder 0, 0
  %p23 = pnand %p22, %p21
  %p24 = pneg %p23
  %s25 = sadd.s32 0, 2
  %s26 = scalar_select %p24, %s25, 0
  %s27 = ssub.s32 1, %s26
  %p28 = scmp.eq.s32.totalorder 0, 0
  // Predicated region
  $region6: #{embedding_forward.1} parent=0 // pred_check
    %p29 = pneg %p28
  $region7: #{embedding_forward.1} parent=0 // pred_check_branch
    %31 = sbr.rel (%p29) target = $region9
  $region8: #{embedding_forward.1} parent=0 // pred_region
    %s32 = sld [smem:[#allocation6]]
    %s33 = scalar_lea.hbm %s2, %s32
    // Predicated region
    $region10: #{embedding_forward.1} parent=8 // pred_check
      _
    $region11: #{embedding_forward.1} parent=8 // pred_check_branch
      %35 = sbr.rel target = $region13
    $region12: #{embedding_forward.1} parent=8 // pred_region
      %36 = sst [smem:[#allocation10]] [#allocation9]
      %37 = sst [smem:[#allocation11]] [#allocation8]
    $region13: #{embedding_forward.1} parent=8 // pred_fallthru
      _
    %39 = shalt.err (0)
    %s41 = sshll.u32 %s33, 4
    %s42 = int_to_ptr.hbm [resolvable:$true] %s41
    %s43 = sshll.u32 [#allocation2], 4
    %s44 = int_to_ptr.vmem [resolvable:$true] %s43
    %46 = dma.hbm_to_vmem [thread:$0]  %s42, 16, %s44, [#allocation3]
    %s47 = sadd.s32 0, 1
    %s48 = sld [smem:[#allocation6 + %s47]]
    %s49 = scalar_lea.hbm %s2, %s48
    %s50 = scalar_lea.vmem [#allocation2], 1
    // Predicated region
    $region14: #{embedding_forward.1} parent=8 // pred_check
      _
    $region15: #{embedding_forward.1} parent=8 // pred_check_branch
      %52 = sbr.rel target = $region17
    $region16: #{embedding_forward.1} parent=8 // pred_region
      %53 = sst [smem:[#allocation10]] [#allocation13]
      %54 = sst [smem:[#allocation11]] [#allocation12]
    $region17: #{embedding_forward.1} parent=8 // pred_fallthru
      _
    %56 = shalt.err (0)
    %s58 = sshll.u32 %s49, 4
    %s59 = int_to_ptr.hbm [resolvable:$true] %s58
    %s60 = sshll.u32 %s50, 4
    %s61 = int_to_ptr.vmem [resolvable:$true] %s60
    %63 = dma.hbm_to_vmem [thread:$0]  %s59, 16, %s61, [#allocation3]
    %s64 = sadd.s32 0, 2
    %s65 = sld [smem:[#allocation6 + %s64]]
    %s66 = scalar_lea.hbm %s2, %s65
    %s67 = scalar_lea.vmem [#allocation2], 2
    // Predicated region
    $region18: #{embedding_forward.1} parent=8 // pred_check
      _
    $region19: #{embedding_forward.1} parent=8 // pred_check_branch
      %69 = sbr.rel target = $region21
    $region20: #{embedding_forward.1} parent=8 // pred_region
      %70 = sst [smem:[#allocation10]] [#allocation15]
      %71 = sst [smem:[#allocation11]] [#allocation14]
    $region21: #{embedding_forward.1} parent=8 // pred_fallthru
      _
    %73 = shalt.err (0)
    %s75 = sshll.u32 %s66, 4
    %s76 = int_to_ptr.hbm [resolvable:$true] %s75
    %s77 = sshll.u32 %s67, 4
    %s78 = int_to_ptr.vmem [resolvable:$true] %s77
    %80 = dma.hbm_to_vmem [thread:$0]  %s76, 16, %s78, [#allocation3]
    %s81 = sadd.s32 0, 3
    %s82 = sld [smem:[#allocation6 + %s81]]
    %s83 = scalar_lea.hbm %s2, %s82
    %s84 = scalar_lea.vmem [#allocation2], 3
    // Predicated region
    $region22: #{embedding_forward.1} parent=8 // pred_check
      _
    $region23: #{embedding_forward.1} parent=8 // pred_check_branch
      %86 = sbr.rel target = $region25
    $region24: #{embedding_forward.1} parent=8 // pred_region
      %87 = sst [smem:[#allocation10]] [#allocation17]
      %88 = sst [smem:[#allocation11]] [#allocation16]
    $region25: #{embedding_forward.1} parent=8 // pred_fallthru
      _
    %90 = shalt.err (0)
    %s92 = sshll.u32 %s83, 4
    %s93 = int_to_ptr.hbm [resolvable:$true] %s92
    %s94 = sshll.u32 %s84, 4
    %s95 = int_to_ptr.vmem [resolvable:$true] %s94
    %97 = dma.hbm_to_vmem [thread:$0]  %s93, 16, %s95, [#allocation3]
    %s98 = sadd.s32 0, 4
    %s99 = sld [smem:[#allocation6 + %s98]]
    %s100 = scalar_lea.hbm %s2, %s99
    %s101 = scalar_lea.vmem [#allocation2], 4
    // Predicated region
    $region26: #{embedding_forward.1} parent=8 // pred_check
      _
    $region27: #{embedding_forward.1} parent=8 // pred_check_branch
      %103 = sbr.rel target = $region29
    $region28: #{embedding_forward.1} parent=8 // pred_region
      %104 = sst [smem:[#allocation10]] [#allocation19]
      %105 = sst [smem:[#allocation11]] [#allocation18]
    $region29: #{embedding_forward.1} parent=8 // pred_fallthru
      _
    %107 = shalt.err (0)
    %s109 = sshll.u32 %s100, 4
    %s110 = int_to_ptr.hbm [resolvable:$true] %s109
    %s111 = sshll.u32 %s101, 4
    %s112 = int_to_ptr.vmem [resolvable:$true] %s111
    %114 = dma.hbm_to_vmem [thread:$0]  %s110, 16, %s112, [#allocation3]
    %s115 = sadd.s32 0, 5
    %s116 = sld [smem:[#allocation6 + %s115]]
    %s117 = scalar_lea.hbm %s2, %s116
    %s118 = scalar_lea.vmem [#allocation2], 5
    // Predicated region
    $region30: #{embedding_forward.1} parent=8 // pred_check
      _
    $region31: #{embedding_forward.1} parent=8 // pred_check_branch
      %120 = sbr.rel target = $region33
    $region32: #{embedding_forward.1} parent=8 // pred_region
      %121 = sst [smem:[#allocation10]] [#allocation21]
      %122 = sst [smem:[#allocation11]] [#allocation20]
    $region33: #{embedding_forward.1} parent=8 // pred_fallthru
      _
    %124 = shalt.err (0)
    %s126 = sshll.u32 %s117, 4
    %s127 = int_to_ptr.hbm [resolvable:$true] %s126
    %s128 = sshll.u32 %s118, 4
    %s129 = int_to_ptr.vmem [resolvable:$true] %s128
    %131 = dma.hbm_to_vmem [thread:$0]  %s127, 16, %s129, [#allocation3]
    %s132 = sadd.s32 0, 6
    %s133 = sld [smem:[#allocation6 + %s132]]
    %s134 = scalar_lea.hbm %s2, %s133
    %s135 = scalar_lea.vmem [#allocation2], 6
    // Predicated region
    $region34: #{embedding_forward.1} parent=8 // pred_check
      _
    $region35: #{embedding_forward.1} parent=8 // pred_check_branch
      %137 = sbr.rel target = $region37
    $region36: #{embedding_forward.1} parent=8 // pred_region
      %138 = sst [smem:[#allocation10]] [#allocation23]
      %139 = sst [smem:[#allocation11]] [#allocation22]
    $region37: #{embedding_forward.1} parent=8 // pred_fallthru
      _
    %141 = shalt.err (0)
    %s143 = sshll.u32 %s134, 4
    %s144 = int_to_ptr.hbm [resolvable:$true] %s143
    %s145 = sshll.u32 %s135, 4
    %s146 = int_to_ptr.vmem [resolvable:$true] %s145
    %148 = dma.hbm_to_vmem [thread:$0]  %s144, 16, %s146, [#allocation3]
    %s149 = sadd.s32 0, 7
    %s150 = sld [smem:[#allocation6 + %s149]]
    %s151 = scalar_lea.hbm %s2, %s150
    %s152 = scalar_lea.vmem [#allocation2], 7
    // Predicated region
    $region38: #{embedding_forward.1} parent=8 // pred_check
      _
    $region39: #{embedding_forward.1} parent=8 // pred_check_branch
      %154 = sbr.rel target = $region41
    $region40: #{embedding_forward.1} parent=8 // pred_region
      %155 = sst [smem:[#allocation10]] [#allocation25]
      %156 = sst [smem:[#allocation11]] [#allocation24]
    $region41: #{embedding_forward.1} parent=8 // pred_fallthru
      _
    %158 = shalt.err (0)
    %s160 = sshll.u32 %s151, 4
    %s161 = int_to_ptr.hbm [resolvable:$true] %s160
    %s162 = sshll.u32 %s152, 4
    %s163 = int_to_ptr.vmem [resolvable:$true] %s162
    %165 = dma.hbm_to_vmem [thread:$0]  %s161, 16, %s163, [#allocation3]
    %s166 = sadd.s32 0, 8
    %s167 = sld [smem:[#allocation6 + %s166]]
    %s168 = scalar_lea.hbm %s2, %s167
    %s169 = scalar_lea.vmem [#allocation2], 8
    // Predicated region
    $region42: #{embedding_forward.1} parent=8 // pred_check
      _
    $region43: #{embedding_forward.1} parent=8 // pred_check_branch
      %171 = sbr.rel target = $region45
    $region44: #{embedding_forward.1} parent=8 // pred_region
      %172 = sst [smem:[#allocation10]] [#allocation27]
      %173 = sst [smem:[#allocation11]] [#allocation26]
    $region45: #{embedding_forward.1} parent=8 // pred_fallthru
      _
    %175 = shalt.err (0)
    %s177 = sshll.u32 %s168, 4
    %s178 = int_to_ptr.hbm [resolvable:$true] %s177
    %s179 = sshll.u32 %s169, 4
    %s180 = int_to_ptr.vmem [resolvable:$true] %s179
    %182 = dma.hbm_to_vmem [thread:$0]  %s178, 16, %s180, [#allocation3]
    %s183 = sadd.s32 0, 9
    %s184 = sld [smem:[#allocation6 + %s183]]
    %s185 = scalar_lea.hbm %s2, %s184
    %s186 = scalar_lea.vmem [#allocation2], 9
    // Predicated region
    $region46: #{embedding_forward.1} parent=8 // pred_check
      _
    $region47: #{embedding_forward.1} parent=8 // pred_check_branch
      %188 = sbr.rel target = $region49
    $region48: #{embedding_forward.1} parent=8 // pred_region
      %189 = sst [smem:[#allocation10]] [#allocation29]
      %190 = sst [smem:[#allocation11]] [#allocation28]
    $region49: #{embedding_forward.1} parent=8 // pred_fallthru
      _
    %192 = shalt.err (0)
    %s194 = sshll.u32 %s185, 4
    %s195 = int_to_ptr.hbm [resolvable:$true] %s194
    %s196 = sshll.u32 %s186, 4
    %s197 = int_to_ptr.vmem [resolvable:$true] %s196
    %199 = dma.hbm_to_vmem [thread:$0]  %s195, 16, %s197, [#allocation3]
    %s200 = sadd.s32 0, 10
    %s201 = sld [smem:[#allocation6 + %s200]]
    %s202 = scalar_lea.hbm %s2, %s201
    %s203 = scalar_lea.vmem [#allocation2], 10
    // Predicated region
    $region50: #{embedding_forward.1} parent=8 // pred_check
      _
    $region51: #{embedding_forward.1} parent=8 // pred_check_branch
      %205 = sbr.rel target = $region53
    $region52: #{embedding_forward.1} parent=8 // pred_region
      %206 = sst [smem:[#allocation10]] [#allocation31]
      %207 = sst [smem:[#allocation11]] [#allocation30]
    $region53: #{embedding_forward.1} parent=8 // pred_fallthru
      _
    %209 = shalt.err (0)
    %s211 = sshll.u32 %s202, 4
    %s212 = int_to_ptr.hbm [resolvable:$true] %s211
    %s213 = sshll.u32 %s203, 4
    %s214 = int_to_ptr.vmem [resolvable:$true] %s213
    %216 = dma.hbm_to_vmem [thread:$0]  %s212, 16, %s214, [#allocation3]
    %s217 = sadd.s32 0, 11
    %s218 = sld [smem:[#allocation6 + %s217]]
    %s219 = scalar_lea.hbm %s2, %s218
    %s220 = scalar_lea.vmem [#allocation2], 11
    // Predicated region
    $region54: #{embedding_forward.1} parent=8 // pred_check
      _
    $region55: #{embedding_forward.1} parent=8 // pred_check_branch
      %222 = sbr.rel target = $region57
    $region56: #{embedding_forward.1} parent=8 // pred_region
      %223 = sst [smem:[#allocation10]] [#allocation33]
      %224 = sst [smem:[#allocation11]] [#allocation32]
    $region57: #{embedding_forward.1} parent=8 // pred_fallthru
      _
    %226 = shalt.err (0)
    %s228 = sshll.u32 %s219, 4
    %s229 = int_to_ptr.hbm [resolvable:$true] %s228
    %s230 = sshll.u32 %s220, 4
    %s231 = int_to_ptr.vmem [resolvable:$true] %s230
    %233 = dma.hbm_to_vmem [thread:$0]  %s229, 16, %s231, [#allocation3]
    %s234 = sadd.s32 0, 12
    %s235 = sld [smem:[#allocation6 + %s234]]
    %s236 = scalar_lea.hbm %s2, %s235
    %s237 = scalar_lea.vmem [#allocation2], 12
    // Predicated region
    $region58: #{embedding_forward.1} parent=8 // pred_check
      _
    $region59: #{embedding_forward.1} parent=8 // pred_check_branch
      %239 = sbr.rel target = $region61
    $region60: #{embedding_forward.1} parent=8 // pred_region
      %240 = sst [smem:[#allocation10]] [#allocation35]
      %241 = sst [smem:[#allocation11]] [#allocation34]
    $region61: #{embedding_forward.1} parent=8 // pred_fallthru
      _
    %243 = shalt.err (0)
    %s245 = sshll.u32 %s236, 4
    %s246 = int_to_ptr.hbm [resolvable:$true] %s245
    %s247 = sshll.u32 %s237, 4
    %s248 = int_to_ptr.vmem [resolvable:$true] %s247
    %250 = dma.hbm_to_vmem [thread:$0]  %s246, 16, %s248, [#allocation3]
    %s251 = sadd.s32 0, 13
    %s252 = sld [smem:[#allocation6 + %s251]]
    %s253 = scalar_lea.hbm %s2, %s252
    %s254 = scalar_lea.vmem [#allocation2], 13
    // Predicated region
    $region62: #{embedding_forward.1} parent=8 // pred_check
      _
    $region63: #{embedding_forward.1} parent=8 // pred_check_branch
      %256 = sbr.rel target = $region65
    $region64: #{embedding_forward.1} parent=8 // pred_region
      %257 = sst [smem:[#allocation10]] [#allocation37]
      %258 = sst [smem:[#allocation11]] [#allocation36]
    $region65: #{embedding_forward.1} parent=8 // pred_fallthru
      _
    %260 = shalt.err (0)
    %s262 = sshll.u32 %s253, 4
    %s263 = int_to_ptr.hbm [resolvable:$true] %s262
    %s264 = sshll.u32 %s254, 4
    %s265 = int_to_ptr.vmem [resolvable:$true] %s264
    %267 = dma.hbm_to_vmem [thread:$0]  %s263, 16, %s265, [#allocation3]
    %s268 = sadd.s32 0, 14
    %s269 = sld [smem:[#allocation6 + %s268]]
    %s270 = scalar_lea.hbm %s2, %s269
    %s271 = scalar_lea.vmem [#allocation2], 14
    // Predicated region
    $region66: #{embedding_forward.1} parent=8 // pred_check
      _
    $region67: #{embedding_forward.1} parent=8 // pred_check_branch
      %273 = sbr.rel target = $region69
    $region68: #{embedding_forward.1} parent=8 // pred_region
      %274 = sst [smem:[#allocation10]] [#allocation39]
      %275 = sst [smem:[#allocation11]] [#allocation38]
    $region69: #{embedding_forward.1} parent=8 // pred_fallthru
      _
    %277 = shalt.err (0)
    %s279 = sshll.u32 %s270, 4
    %s280 = int_to_ptr.hbm [resolvable:$true] %s279
    %s281 = sshll.u32 %s271, 4
    %s282 = int_to_ptr.vmem [resolvable:$true] %s281
    %284 = dma.hbm_to_vmem [thread:$0]  %s280, 16, %s282, [#allocation3]
    %s285 = sadd.s32 0, 15
    %s286 = sld [smem:[#allocation6 + %s285]]
    %s287 = scalar_lea.hbm %s2, %s286
    %s288 = scalar_lea.vmem [#allocation2], 15
    // Predicated region
    $region70: #{embedding_forward.1} parent=8 // pred_check
      _
    $region71: #{embedding_forward.1} parent=8 // pred_check_branch
      %290 = sbr.rel target = $region73
    $region72: #{embedding_forward.1} parent=8 // pred_region
      %291 = sst [smem:[#allocation10]] [#allocation41]
      %292 = sst [smem:[#allocation11]] [#allocation40]
    $region73: #{embedding_forward.1} parent=8 // pred_fallthru
      _
    %294 = shalt.err (0)
    %s296 = sshll.u32 %s287, 4
    %s297 = int_to_ptr.hbm [resolvable:$true] %s296
    %s298 = sshll.u32 %s288, 4
    %s299 = int_to_ptr.vmem [resolvable:$true] %s298
    %301 = dma.hbm_to_vmem [thread:$0]  %s297, 16, %s299, [#allocation3]
  $region9: #{embedding_forward.1} parent=0 // pred_fallthru
    _
  %p302 = scmp.ge.s32.totalorder 0, 1
  // Predicated region
  $region74: #{embedding_forward.1} parent=0 // pred_check
    %p303 = pneg %p302
  $region75: #{embedding_forward.1} parent=0 // pred_check_branch
    %305 = sbr.rel (%p303) target = $region77
  $region76: #{embedding_forward.1} parent=0 // pred_region
    %s306 = ssub.s32 0, 1
    %s307 = smul.u32 %s306, 16
    %s308 = scalar_lea.sflag [#allocation4], %s27
    %s309 = smul.u32 16, 1
    %s310 = sshll.u32 %s309, 4
    %311 = dma.done %s308, %s310
  $region77: #{embedding_forward.1} parent=0 // pred_fallthru
    _
  %s312 = sadd.s32 0, 1
  %p313 = scmp.lt.s32.totalorder %s312, 1
  // Predicated region
  $region78: #{embedding_forward.1} parent=0 // pred_check
    %p314 = pneg %p313
  $region79: #{embedding_forward.1} parent=0 // pred_check_branch
    %316 = sbr.rel (%p314) target = $region81
  $region80: #{embedding_forward.1} parent=0 // pred_region
    %s317 = smul.u32 %s312, 16
    %s318 = sld [smem:[#allocation6 + %s317]]
    %s319 = scalar_lea.hbm %s2, %s318
    %s320 = smul.u32 %s27, 16
    %s321 = scalar_lea.vmem [#allocation2], %s320
    %s322 = scalar_lea.sflag [#allocation3], %s27
    // Predicated region
    $region82: #{embedding_forward.1} parent=80 // pred_check
      _
    $region83: #{embedding_forward.1} parent=80 // pred_check_branch
      %324 = sbr.rel target = $region85
    $region84: #{embedding_forward.1} parent=80 // pred_region
      %325 = sst [smem:[#allocation10]] [#allocation43]
      %326 = sst [smem:[#allocation11]] [#allocation42]
    $region85: #{embedding_forward.1} parent=80 // pred_fallthru
      _
    %328 = shalt.err (0)
    %s330 = sshll.u32 %s319, 4
    %s331 = int_to_ptr.hbm [resolvable:$true] %s330
    %s332 = sshll.u32 %s321, 4
    %s333 = int_to_ptr.vmem [resolvable:$true] %s332
    %335 = dma.hbm_to_vmem [thread:$0]  %s331, 16, %s333, %s322
    %s336 = sadd.s32 %s317, 1
    %s337 = sld [smem:[#allocation6 + %s336]]
    %s338 = scalar_lea.hbm %s2, %s337
    %s339 = sadd.s32 1, %s320
    %s340 = scalar_lea.vmem [#allocation2], %s339
    // Predicated region
    $region86: #{embedding_forward.1} parent=80 // pred_check
      _
    $region87: #{embedding_forward.1} parent=80 // pred_check_branch
      %342 = sbr.rel target = $region89
    $region88: #{embedding_forward.1} parent=80 // pred_region
      %343 = sst [smem:[#allocation10]] [#allocation45]
      %344 = sst [smem:[#allocation11]] [#allocation44]
    $region89: #{embedding_forward.1} parent=80 // pred_fallthru
      _
    %346 = shalt.err (0)
    %s348 = sshll.u32 %s338, 4
    %s349 = int_to_ptr.hbm [resolvable:$true] %s348
    %s350 = sshll.u32 %s340, 4
    %s351 = int_to_ptr.vmem [resolvable:$true] %s350
    %353 = dma.hbm_to_vmem [thread:$0]  %s349, 16, %s351, %s322
    %s354 = sadd.s32 %s317, 2
    %s355 = sld [smem:[#allocation6 + %s354]]
    %s356 = scalar_lea.hbm %s2, %s355
    %s357 = sadd.s32 2, %s320
    %s358 = scalar_lea.vmem [#allocation2], %s357
    // Predicated region
    $region90: #{embedding_forward.1} parent=80 // pred_check
      _
    $region91: #{embedding_forward.1} parent=80 // pred_check_branch
      %360 = sbr.rel target = $region93
    $region92: #{embedding_forward.1} parent=80 // pred_region
      %361 = sst [smem:[#allocation10]] [#allocation47]
      %362 = sst [smem:[#allocation11]] [#allocation46]
    $region93: #{embedding_forward.1} parent=80 // pred_fallthru
      _
    %364 = shalt.err (0)
    %s366 = sshll.u32 %s356, 4
    %s367 = int_to_ptr.hbm [resolvable:$true] %s366
    %s368 = sshll.u32 %s358, 4
    %s369 = int_to_ptr.vmem [resolvable:$true] %s368
    %371 = dma.hbm_to_vmem [thread:$0]  %s367, 16, %s369, %s322
    %s372 = sadd.s32 %s317, 3
    %s373 = sld [smem:[#allocation6 + %s372]]
    %s374 = scalar_lea.hbm %s2, %s373
    %s375 = sadd.s32 3, %s320
    %s376 = scalar_lea.vmem [#allocation2], %s375
    // Predicated region
    $region94: #{embedding_forward.1} parent=80 // pred_check
      _
    $region95: #{embedding_forward.1} parent=80 // pred_check_branch
      %378 = sbr.rel target = $region97
    $region96: #{embedding_forward.1} parent=80 // pred_region
      %379 = sst [smem:[#allocation10]] [#allocation49]
      %380 = sst [smem:[#allocation11]] [#allocation48]
    $region97: #{embedding_forward.1} parent=80 // pred_fallthru
      _
    %382 = shalt.err (0)
    %s384 = sshll.u32 %s374, 4
    %s385 = int_to_ptr.hbm [resolvable:$true] %s384
    %s386 = sshll.u32 %s376, 4
    %s387 = int_to_ptr.vmem [resolvable:$true] %s386
    %389 = dma.hbm_to_vmem [thread:$0]  %s385, 16, %s387, %s322
    %s390 = sadd.s32 %s317, 4
    %s391 = sld [smem:[#allocation6 + %s390]]
    %s392 = scalar_lea.hbm %s2, %s391
    %s393 = sadd.s32 4, %s320
    %s394 = scalar_lea.vmem [#allocation2], %s393
    // Predicated region
    $region98: #{embedding_forward.1} parent=80 // pred_check
      _
    $region99: #{embedding_forward.1} parent=80 // pred_check_branch
      %396 = sbr.rel target = $region101
    $region100: #{embedding_forward.1} parent=80 // pred_region
      %397 = sst [smem:[#allocation10]] [#allocation51]
      %398 = sst [smem:[#allocation11]] [#allocation50]
    $region101: #{embedding_forward.1} parent=80 // pred_fallthru
      _
    %400 = shalt.err (0)
    %s402 = sshll.u32 %s392, 4
    %s403 = int_to_ptr.hbm [resolvable:$true] %s402
    %s404 = sshll.u32 %s394, 4
    %s405 = int_to_ptr.vmem [resolvable:$true] %s404
    %407 = dma.hbm_to_vmem [thread:$0]  %s403, 16, %s405, %s322
    %s408 = sadd.s32 %s317, 5
    %s409 = sld [smem:[#allocation6 + %s408]]
    %s410 = scalar_lea.hbm %s2, %s409
    %s411 = sadd.s32 5, %s320
    %s412 = scalar_lea.vmem [#allocation2], %s411
    // Predicated region
    $region102: #{embedding_forward.1} parent=80 // pred_check
      _
    $region103: #{embedding_forward.1} parent=80 // pred_check_branch
      %414 = sbr.rel target = $region105
    $region104: #{embedding_forward.1} parent=80 // pred_region
      %415 = sst [smem:[#allocation10]] [#allocation53]
      %416 = sst [smem:[#allocation11]] [#allocation52]
    $region105: #{embedding_forward.1} parent=80 // pred_fallthru
      _
    %418 = shalt.err (0)
    %s420 = sshll.u32 %s410, 4
    %s421 = int_to_ptr.hbm [resolvable:$true] %s420
    %s422 = sshll.u32 %s412, 4
    %s423 = int_to_ptr.vmem [resolvable:$true] %s422
    %425 = dma.hbm_to_vmem [thread:$0]  %s421, 16, %s423, %s322
    %s426 = sadd.s32 %s317, 6
    %s427 = sld [smem:[#allocation6 + %s426]]
    %s428 = scalar_lea.hbm %s2, %s427
    %s429 = sadd.s32 6, %s320
    %s430 = scalar_lea.vmem [#allocation2], %s429
    // Predicated region
    $region106: #{embedding_forward.1} parent=80 // pred_check
      _
    $region107: #{embedding_forward.1} parent=80 // pred_check_branch
      %432 = sbr.rel target = $region109
    $region108: #{embedding_forward.1} parent=80 // pred_region
      %433 = sst [smem:[#allocation10]] [#allocation55]
      %434 = sst [smem:[#allocation11]] [#allocation54]
    $region109: #{embedding_forward.1} parent=80 // pred_fallthru
      _
    %436 = shalt.err (0)
    %s438 = sshll.u32 %s428, 4
    %s439 = int_to_ptr.hbm [resolvable:$true] %s438
    %s440 = sshll.u32 %s430, 4
    %s441 = int_to_ptr.vmem [resolvable:$true] %s440
    %443 = dma.hbm_to_vmem [thread:$0]  %s439, 16, %s441, %s322
    %s444 = sadd.s32 %s317, 7
    %s445 = sld [smem:[#allocation6 + %s444]]
    %s446 = scalar_lea.hbm %s2, %s445
    %s447 = sadd.s32 7, %s320
    %s448 = scalar_lea.vmem [#allocation2], %s447
    // Predicated region
    $region110: #{embedding_forward.1} parent=80 // pred_check
      _
    $region111: #{embedding_forward.1} parent=80 // pred_check_branch
      %450 = sbr.rel target = $region113
    $region112: #{embedding_forward.1} parent=80 // pred_region
      %451 = sst [smem:[#allocation10]] [#allocation57]
      %452 = sst [smem:[#allocation11]] [#allocation56]
    $region113: #{embedding_forward.1} parent=80 // pred_fallthru
      _
    %454 = shalt.err (0)
    %s456 = sshll.u32 %s446, 4
    %s457 = int_to_ptr.hbm [resolvable:$true] %s456
    %s458 = sshll.u32 %s448, 4
    %s459 = int_to_ptr.vmem [resolvable:$true] %s458
    %461 = dma.hbm_to_vmem [thread:$0]  %s457, 16, %s459, %s322
    %s462 = sadd.s32 %s317, 8
    %s463 = sld [smem:[#allocation6 + %s462]]
    %s464 = scalar_lea.hbm %s2, %s463
    %s465 = sadd.s32 8, %s320
    %s466 = scalar_lea.vmem [#allocation2], %s465
    // Predicated region
    $region114: #{embedding_forward.1} parent=80 // pred_check
      _
    $region115: #{embedding_forward.1} parent=80 // pred_check_branch
      %468 = sbr.rel target = $region117
    $region116: #{embedding_forward.1} parent=80 // pred_region
      %469 = sst [smem:[#allocation10]] [#allocation59]
      %470 = sst [smem:[#allocation11]] [#allocation58]
    $region117: #{embedding_forward.1} parent=80 // pred_fallthru
      _
    %472 = shalt.err (0)
    %s474 = sshll.u32 %s464, 4
    %s475 = int_to_ptr.hbm [resolvable:$true] %s474
    %s476 = sshll.u32 %s466, 4
    %s477 = int_to_ptr.vmem [resolvable:$true] %s476
    %479 = dma.hbm_to_vmem [thread:$0]  %s475, 16, %s477, %s322
    %s480 = sadd.s32 %s317, 9
    %s481 = sld [smem:[#allocation6 + %s480]]
    %s482 = scalar_lea.hbm %s2, %s481
    %s483 = sadd.s32 9, %s320
    %s484 = scalar_lea.vmem [#allocation2], %s483
    // Predicated region
    $region118: #{embedding_forward.1} parent=80 // pred_check
      _
    $region119: #{embedding_forward.1} parent=80 // pred_check_branch
      %486 = sbr.rel target = $region121
    $region120: #{embedding_forward.1} parent=80 // pred_region
      %487 = sst [smem:[#allocation10]] [#allocation61]
      %488 = sst [smem:[#allocation11]] [#allocation60]
    $region121: #{embedding_forward.1} parent=80 // pred_fallthru
      _
    %490 = shalt.err (0)
    %s492 = sshll.u32 %s482, 4
    %s493 = int_to_ptr.hbm [resolvable:$true] %s492
    %s494 = sshll.u32 %s484, 4
    %s495 = int_to_ptr.vmem [resolvable:$true] %s494
    %497 = dma.hbm_to_vmem [thread:$0]  %s493, 16, %s495, %s322
    %s498 = sadd.s32 %s317, 10
    %s499 = sld [smem:[#allocation6 + %s498]]
    %s500 = scalar_lea.hbm %s2, %s499
    %s501 = sadd.s32 10, %s320
    %s502 = scalar_lea.vmem [#allocation2], %s501
    // Predicated region
    $region122: #{embedding_forward.1} parent=80 // pred_check
      _
    $region123: #{embedding_forward.1} parent=80 // pred_check_branch
      %504 = sbr.rel target = $region125
    $region124: #{embedding_forward.1} parent=80 // pred_region
      %505 = sst [smem:[#allocation10]] [#allocation63]
      %506 = sst [smem:[#allocation11]] [#allocation62]
    $region125: #{embedding_forward.1} parent=80 // pred_fallthru
      _
    %508 = shalt.err (0)
    %s510 = sshll.u32 %s500, 4
    %s511 = int_to_ptr.hbm [resolvable:$true] %s510
    %s512 = sshll.u32 %s502, 4
    %s513 = int_to_ptr.vmem [resolvable:$true] %s512
    %515 = dma.hbm_to_vmem [thread:$0]  %s511, 16, %s513, %s322
    %s516 = sadd.s32 %s317, 11
    %s517 = sld [smem:[#allocation6 + %s516]]
    %s518 = scalar_lea.hbm %s2, %s517
    %s519 = sadd.s32 11, %s320
    %s520 = scalar_lea.vmem [#allocation2], %s519
    // Predicated region
    $region126: #{embedding_forward.1} parent=80 // pred_check
      _
    $region127: #{embedding_forward.1} parent=80 // pred_check_branch
      %522 = sbr.rel target = $region129
    $region128: #{embedding_forward.1} parent=80 // pred_region
      %523 = sst [smem:[#allocation10]] [#allocation65]
      %524 = sst [smem:[#allocation11]] [#allocation64]
    $region129: #{embedding_forward.1} parent=80 // pred_fallthru
      _
    %526 = shalt.err (0)
    %s528 = sshll.u32 %s518, 4
    %s529 = int_to_ptr.hbm [resolvable:$true] %s528
    %s530 = sshll.u32 %s520, 4
    %s531 = int_to_ptr.vmem [resolvable:$true] %s530
    %533 = dma.hbm_to_vmem [thread:$0]  %s529, 16, %s531, %s322
    %s534 = sadd.s32 %s317, 12
    %s535 = sld [smem:[#allocation6 + %s534]]
    %s536 = scalar_lea.hbm %s2, %s535
    %s537 = sadd.s32 12, %s320
    %s538 = scalar_lea.vmem [#allocation2], %s537
    // Predicated region
    $region130: #{embedding_forward.1} parent=80 // pred_check
      _
    $region131: #{embedding_forward.1} parent=80 // pred_check_branch
      %540 = sbr.rel target = $region133
    $region132: #{embedding_forward.1} parent=80 // pred_region
      %541 = sst [smem:[#allocation10]] [#allocation67]
      %542 = sst [smem:[#allocation11]] [#allocation66]
    $region133: #{embedding_forward.1} parent=80 // pred_fallthru
      _
    %544 = shalt.err (0)
    %s546 = sshll.u32 %s536, 4
    %s547 = int_to_ptr.hbm [resolvable:$true] %s546
    %s548 = sshll.u32 %s538, 4
    %s549 = int_to_ptr.vmem [resolvable:$true] %s548
    %551 = dma.hbm_to_vmem [thread:$0]  %s547, 16, %s549, %s322
    %s552 = sadd.s32 %s317, 13
    %s553 = sld [smem:[#allocation6 + %s552]]
    %s554 = scalar_lea.hbm %s2, %s553
    %s555 = sadd.s32 13, %s320
    %s556 = scalar_lea.vmem [#allocation2], %s555
    // Predicated region
    $region134: #{embedding_forward.1} parent=80 // pred_check
      _
    $region135: #{embedding_forward.1} parent=80 // pred_check_branch
      %558 = sbr.rel target = $region137
    $region136: #{embedding_forward.1} parent=80 // pred_region
      %559 = sst [smem:[#allocation10]] [#allocation69]
      %560 = sst [smem:[#allocation11]] [#allocation68]
    $region137: #{embedding_forward.1} parent=80 // pred_fallthru
      _
    %562 = shalt.err (0)
    %s564 = sshll.u32 %s554, 4
    %s565 = int_to_ptr.hbm [resolvable:$true] %s564
    %s566 = sshll.u32 %s556, 4
    %s567 = int_to_ptr.vmem [resolvable:$true] %s566
    %569 = dma.hbm_to_vmem [thread:$0]  %s565, 16, %s567, %s322
    %s570 = sadd.s32 %s317, 14
    %s571 = sld [smem:[#allocation6 + %s570]]
    %s572 = scalar_lea.hbm %s2, %s571
    %s573 = sadd.s32 14, %s320
    %s574 = scalar_lea.vmem [#allocation2], %s573
    // Predicated region
    $region138: #{embedding_forward.1} parent=80 // pred_check
      _
    $region139: #{embedding_forward.1} parent=80 // pred_check_branch
      %576 = sbr.rel target = $region141
    $region140: #{embedding_forward.1} parent=80 // pred_region
      %577 = sst [smem:[#allocation10]] [#allocation71]
      %578 = sst [smem:[#allocation11]] [#allocation70]
    $region141: #{embedding_forward.1} parent=80 // pred_fallthru
      _
    %580 = shalt.err (0)
    %s582 = sshll.u32 %s572, 4
    %s583 = int_to_ptr.hbm [resolvable:$true] %s582
    %s584 = sshll.u32 %s574, 4
    %s585 = int_to_ptr.vmem [resolvable:$true] %s584
    %587 = dma.hbm_to_vmem [thread:$0]  %s583, 16, %s585, %s322
    %s588 = sadd.s32 %s317, 15
    %s589 = sld [smem:[#allocation6 + %s588]]
    %s590 = scalar_lea.hbm %s2, %s589
    %s591 = sadd.s32 15, %s320
    %s592 = scalar_lea.vmem [#allocation2], %s591
    // Predicated region
    $region142: #{embedding_forward.1} parent=80 // pred_check
      _
    $region143: #{embedding_forward.1} parent=80 // pred_check_branch
      %594 = sbr.rel target = $region145
    $region144: #{embedding_forward.1} parent=80 // pred_region
      %595 = sst [smem:[#allocation10]] [#allocation73]
      %596 = sst [smem:[#allocation11]] [#allocation72]
    $region145: #{embedding_forward.1} parent=80 // pred_fallthru
      _
    %598 = shalt.err (0)
    %s600 = sshll.u32 %s590, 4
    %s601 = int_to_ptr.hbm [resolvable:$true] %s600
    %s602 = sshll.u32 %s592, 4
    %s603 = int_to_ptr.vmem [resolvable:$true] %s602
    %605 = dma.hbm_to_vmem [thread:$0]  %s601, 16, %s603, %s322
  $region81: #{embedding_forward.1} parent=0 // pred_fallthru
    _
  %s606 = smul.u32 0, 16
  %s607 = scalar_lea.hbm %s3, %s606
  %s608 = smul.u32 %s26, 16
  %s609 = scalar_lea.vmem [#allocation2], %s608
  %s610 = scalar_lea.sflag [#allocation3], %s26
  %s611 = smul.u32 16, 1
  %s612 = sshll.u32 %s611, 4
  %613 = dma.done %s610, %s612
  %s614 = scalar_lea.sflag [#allocation4], %s26
  // Predicated region
  $region146: #{embedding_forward.1} parent=0 // pred_check
    _
  $region147: #{embedding_forward.1} parent=0 // pred_check_branch
    %616 = sbr.rel target = $region149
  $region148: #{embedding_forward.1} parent=0 // pred_region
    %617 = sst [smem:[#allocation10]] [#allocation75]
    %618 = sst [smem:[#allocation11]] [#allocation74]
  $region149: #{embedding_forward.1} parent=0 // pred_fallthru
    _
  %620 = shalt.err (0)
  %s622 = sshll.u32 %s609, 4
  %s623 = int_to_ptr.vmem [resolvable:$true] %s622
  %s624 = sshll.u32 %s607, 4
  %s625 = int_to_ptr.hbm [resolvable:$true] %s624
  %627 = dma.vmem_to_hbm [thread:$0]  %s623, 256, %s625, %s614
  // Predicated region
  $region150: #{embedding_forward.1} parent=0 // pred_check
    %p628 = pneg %p28
  $region151: #{embedding_forward.1} parent=0 // pred_check_branch
    %630 = sbr.rel (%p628) target = $region153
  $region152: #{embedding_forward.1} parent=0 // pred_region
    %s631 = sshll.u32 %s611, 4
    %632 = dma.done %s614, %s631
  $region153: #{embedding_forward.1} parent=0 // pred_fallthru
    _
  %633 = vsyncmov [#allocation3]
  %s634 = vpop.sfrf %633
  %p635 = scmp.eq.s32.totalorder %s634, 0
  %p636 = pneg %p635
  %638 = shalt.err (%p636)
  %s639 = scalar_lea.sflag [#allocation3], 1
  %640 = vsyncmov %s639
  %s641 = vpop.sfrf %640
  %p642 = scmp.eq.s32.totalorder %s641, 0
  %p643 = pneg %p642
  %645 = shalt.err (%p643)
  %646 = vsyncmov [#allocation4]
  %s647 = vpop.sfrf %646
  %p648 = scmp.eq.s32.totalorder %s647, 0
  %p649 = pneg %p648
  %651 = shalt.err (%p649)
  %s652 = scalar_lea.sflag [#allocation4], 1
  %653 = vsyncmov %s652
  %s654 = vpop.sfrf %653
  %p655 = scmp.eq.s32.totalorder %s654, 0
  %p656 = pneg %p655
  %658 = shalt.err (%p656)

</llo_original>
